<compile_context>
chip_gen: v7x
topology: tpu7x:2x2x1
jax: 0.10.0
libtpu: 0.0.40
codegen_flags: <defaults>
</compile_context>

<pallas_src>
import functools

import jax
import jax.numpy as jnp
from jax.experimental import pallas as pl
from jax.experimental.pallas import tpu as pltpu

N_JOINTS = 24
HIDDEN = 256                 # num_hidden must be 256: (H-64)+(H-192) == H
POS_DIM = HIDDEN - 64        # 192
BETA_DIM = HIDDEN - 192      # 64
IN_PAD = 128                 # 72 (joints*3) + 10 (beta) padded to 128 lanes
OUT_PAD = 128                # lane-dense padded output width
BN_EPS = 1e-5
MAX_TB = 512                 # max batch-tile rows (multiple of 8, VMEM-safe)

LEG_JTS = [0, 1, 2, 3, 4, 5, 7, 8, 10, 11]
LEG_TW = [0, 3, 6, 1, 4, 7]
SPINE_JTS = [0, 1, 2, 3, 6, 9, 12, 13, 14, 15]
SPINE_TW = [2, 5, 11]
ARM_JTS = [9, 12, 13, 14, 16, 17, 18, 19, 20, 21, 22, 23]
ARM_TW = [12, 15, 17, 19, 13, 16, 18, 20]

# stacked part order: 0 = leg, 1 = spine, 2 = arm
PART_SPECS = [(LEG_JTS, len(LEG_TW)), (SPINE_JTS, len(SPINE_TW)), (ARM_JTS, len(ARM_TW))]


# ---------------------------------------------------------------------------
# Chip-generation heuristics (perf-only decisions; safe defaults on error).
# ---------------------------------------------------------------------------
def _device_kind() -> str:
    try:
        return jax.devices()[0].device_kind.lower()
    except Exception:  # pragma: no cover
        return ""


_KIND = _device_kind()
# bf16 elementwise (VALU) only on v6e-class and newer chips.
_HAS_BF16_VALU = not any(t in _KIND for t in ("v2", "v3", "v4", "v5"))
# Chips exposing >1 TensorCore per device keep the (parts, batch) grid so
# dimension_semantics can shard it; single-TC chips may collapse the grid.
_SINGLE_TC = not any(t in _KIND for t in ("v4", "v5p", "v7"))


# ---------------------------------------------------------------------------
# Shared per-part MLP compute (used by both kernel variants).
# Weight/bias/alpha arguments are loader callables so VMEM->vreg loads are
# traced at their point of use (keeps vreg pressure low).
# ---------------------------------------------------------------------------
def _run_part(x_bf, wemb, bemb, wblk, bblk, wf, bf, alpha, *, bf16_epilogue):
    ep = jnp.bfloat16 if bf16_epilogue else jnp.float32

    def dense_prelu(h, w, b, a):
        t = jnp.dot(h.astype(jnp.bfloat16), w, preferred_element_type=jnp.float32)
        t = t.astype(ep) + b.astype(ep)
        return jnp.where(t > 0, t, a.astype(ep) * t)

    # pos + beta embedding (block-diag Linear + folded BN) + per-lane PReLU
    h = dense_prelu(x_bf, wemb(), bemb(), alpha(0))

    # three residual BasicBlocks (Linear+BN+PReLU, Linear+BN+PReLU, skip add)
    for i in range(3):
        t = dense_prelu(h, wblk(2 * i), bblk(2 * i), alpha(1 + 2 * i))
        t = dense_prelu(t, wblk(2 * i + 1), bblk(2 * i + 1), alpha(2 + 2 * i))
        h = (t + h).astype(ep)

    # final Linear (kept f32), written lane-dense (zero-padded to 128 columns)
    return jnp.dot(h.astype(jnp.bfloat16), wf(),
                   preferred_element_type=jnp.float32) + bf()


def _part_kernel(x_ref, wemb_ref, bemb_ref, wblk_ref, bblk_ref,
                 wf_ref, bf_ref, alpha_ref, out_ref, *, bf16_epilogue):
    """Gridded variant: one (part, batch-tile) grid cell per invocation."""
    x = x_ref[...].astype(jnp.bfloat16)
    out_ref[...] = _run_part(
        x,
        wemb=lambda: wemb_ref[...], bemb=lambda: bemb_ref[...],
        wblk=lambda i: wblk_ref[i], bblk=lambda i: bblk_ref[i],
        wf=lambda: wf_ref[...], bf=lambda: bf_ref[...],
        alpha=lambda i: alpha_ref[i],
        bf16_epilogue=bf16_epilogue)


def _fused_kernel(x_ref, wemb_ref, bemb_ref, wblk_ref, bblk_ref,
                  wf_ref, bf_ref, alpha_ref, out_ref, *, bf16_epilogue):
    """Collapsed variant: all three parts unrolled in a single grid step."""
    x = x_ref[...].astype(jnp.bfloat16)
    for p in range(3):
        out_ref[p] = _run_part(
            x,
            wemb=lambda p=p: wemb_ref[p], bemb=lambda p=p: bemb_ref[p],
            wblk=lambda i, p=p: wblk_ref[p, i], bblk=lambda i, p=p: bblk_ref[p, i],
            wf=lambda p=p: wf_ref[p], bf=lambda p=p: bf_ref[p],
            alpha=lambda i, p=p: alpha_ref[p, i],
            bf16_epilogue=bf16_epilogue)


# ---------------------------------------------------------------------------
# Parameter construction (deterministic, synthetic) + BatchNorm folding.
# ---------------------------------------------------------------------------
def _linear_init(key, in_dim, out_dim):
    kw, kb = jax.random.split(key)
    bound = 1.0 / jnp.sqrt(jnp.float32(in_dim))
    w = jax.random.uniform(kw, (in_dim, out_dim), jnp.float32, -bound, bound)
    b = jax.random.uniform(kb, (out_dim,), jnp.float32, -bound, bound)
    return w, b


def _fold_bn(w, b, out_dim):
    # BN eval with default init: gamma=1, beta=0, running_mean=0, running_var=1
    gamma = jnp.ones((out_dim,), jnp.float32)
    beta = jnp.zeros((out_dim,), jnp.float32)
    mean = jnp.zeros((out_dim,), jnp.float32)
    var = jnp.ones((out_dim,), jnp.float32)
    s = gamma / jnp.sqrt(var + BN_EPS)
    return w * s[None, :], (b - mean) * s + beta


def init_part_params(key, jts_index, num_theta):
    """One part's params with the joint gather folded into the embedding
    weight, BN folded into Linear, matmul weights in bf16, output padded."""
    num_jts = len(jts_index)
    in_dim = num_jts * 3
    out_dim = num_theta * 2
    keys = jax.random.split(key, 9)

    wpos, bpos = _linear_init(keys[0], in_dim, POS_DIM)
    wpos, bpos = _fold_bn(wpos, bpos, POS_DIM)
    wbeta, bbeta = _linear_init(keys[1], 10, BETA_DIM)
    wbeta, bbeta = _fold_bn(wbeta, bbeta, BETA_DIM)

    # Fold joint gather + concat into one block-diagonal embedding matmul:
    # input is [p3d.reshape(B,72) | beta(10) | zeros] (B, IN_PAD).
    rows = jnp.asarray([3 * j + c for j in jts_index for c in range(3)], jnp.int32)
    wemb = jnp.zeros((IN_PAD, HIDDEN), jnp.float32)
    wemb = wemb.at[rows].set(jnp.pad(wpos, ((0, 0), (0, BETA_DIM))))
    wemb = wemb.at[N_JOINTS * 3:N_JOINTS * 3 + 10].set(
        jnp.pad(wbeta, ((0, 0), (POS_DIM, 0))))
    bemb = jnp.concatenate([bpos, bbeta]).reshape(1, HIDDEN)

    wblk, bblk = [], []
    for layer in range(6):
        w, b = _linear_init(keys[2 + layer], HIDDEN, HIDDEN)
        w, b = _fold_bn(w, b, HIDDEN)
        wblk.append(w)
        bblk.append(b.reshape(1, HIDDEN))
    wblk = jnp.stack(wblk)                  # (6, 256, 256)
    bblk = jnp.stack(bblk)                  # (6, 1, 256)

    wf, bf = _linear_init(keys[8], HIDDEN, out_dim)
    wf_pad = jnp.zeros((HIDDEN, OUT_PAD), jnp.float32).at[:, :out_dim].set(wf)
    bf_pad = jnp.zeros((1, OUT_PAD), jnp.float32).at[:, :out_dim].set(bf)

    # PReLU alphas (PyTorch default 0.25). Index 0: per-lane embedding alpha
    # (pos alpha lanes 0..191, beta alpha lanes 192..255); 1..6: block alphas.
    alpha_emb = jnp.concatenate([jnp.full((POS_DIM,), 0.25, jnp.float32),
                                 jnp.full((BETA_DIM,), 0.25, jnp.float32)])
    alpha_blk = jnp.full((6, HIDDEN), 0.25, jnp.float32)
    alpha = jnp.concatenate([alpha_emb[None], alpha_blk], axis=0)
    alpha = alpha.reshape(7, 1, HIDDEN)

    return dict(
        wemb=wemb.astype(jnp.bfloat16), bemb=bemb,
        wblk=wblk.astype(jnp.bfloat16), bblk=bblk,
        wf=wf_pad.astype(jnp.bfloat16), bf=bf_pad,
        alpha=alpha,
    )


def init_params(key):
    keys = jax.random.split(key, 3)
    parts = [init_part_params(keys[i], jts, ntw)
             for i, (jts, ntw) in enumerate(PART_SPECS)]
    # stack across parts -> leading part axis for the pallas_call grid
    return {k: jnp.stack([p[k] for p in parts]) for k in parts[0]}


# ---------------------------------------------------------------------------
# Wrapper.
# ---------------------------------------------------------------------------
def smpl_mixik_forward(p3d, beta, params, *, collapse=None, bf16_epilogue=None):
    if bf16_epilogue is None:
        bf16_epilogue = _HAS_BF16_VALU

    B = p3d.shape[0]
    x = jnp.concatenate([p3d.reshape(B, N_JOINTS * 3), beta], axis=-1)

    # Pad the batch to a multiple of 8 sublanes and choose the batch tile.
    b8 = -(-B // 8) * 8
    if b8 <= MAX_TB:
        tb, b_pad = b8, b8
    else:
        tb = MAX_TB
        b_pad = -(-b8 // tb) * tb
    nb = b_pad // tb
    x = jnp.pad(x, ((0, b_pad - B), (0, IN_PAD - x.shape[1])))   # (b_pad, 128)

    if collapse is None:
        # Collapse the part grid on single-TC chips in the tiny-batch regime
        # (removes per-grid-step overhead; total weights ~2.8 MB fit VMEM).
        collapse = _SINGLE_TC and b_pad <= 64

    w_bytes = sum(int(v.size) * v.dtype.itemsize for v in params.values())
    cost = pl.CostEstimate(
        flops=2 * b_pad * 3 * (IN_PAD * HIDDEN + 6 * HIDDEN * HIDDEN + HIDDEN * OUT_PAD),
        transcendentals=0,
        bytes_accessed=w_bytes + b_pad * IN_PAD * 4 + 3 * b_pad * OUT_PAD * 4)

    args = (x, params["wemb"], params["bemb"], params["wblk"], params["bblk"],
            params["wf"], params["bf"], params["alpha"])

    if collapse:
        out = pl.pallas_call(
            functools.partial(_fused_kernel, bf16_epilogue=bf16_epilogue),
            out_shape=jax.ShapeDtypeStruct((3, b_pad, OUT_PAD), jnp.float32),
            grid=(nb,),
            in_specs=[
                pl.BlockSpec((tb, IN_PAD), lambda b: (b, 0)),
                pl.BlockSpec((3, IN_PAD, HIDDEN), lambda b: (0, 0, 0)),
                pl.BlockSpec((3, 1, HIDDEN), lambda b: (0, 0, 0)),
                pl.BlockSpec((3, 6, HIDDEN, HIDDEN), lambda b: (0, 0, 0, 0)),
                pl.BlockSpec((3, 6, 1, HIDDEN), lambda b: (0, 0, 0, 0)),
                pl.BlockSpec((3, HIDDEN, OUT_PAD), lambda b: (0, 0, 0)),
                pl.BlockSpec((3, 1, OUT_PAD), lambda b: (0, 0, 0)),
                pl.BlockSpec((3, 7, 1, HIDDEN), lambda b: (0, 0, 0, 0)),
            ],
            out_specs=pl.BlockSpec((3, tb, OUT_PAD), lambda b: (0, b, 0)),
            compiler_params=pltpu.CompilerParams(
                dimension_semantics=("parallel",)),
            cost_estimate=cost,
        )(*args)
    else:
        # Part axis outermost: weight blocks (index_map ignores b) stay
        # VMEM-resident across all inner batch tiles; both axes "parallel"
        # gives v7x megacore 3*nb cells to shard.
        out = pl.pallas_call(
            functools.partial(_part_kernel, bf16_epilogue=bf16_epilogue),
            out_shape=jax.ShapeDtypeStruct((3, b_pad, OUT_PAD), jnp.float32),
            grid=(3, nb),
            in_specs=[
                pl.BlockSpec((tb, IN_PAD), lambda p, b: (b, 0)),
                pl.BlockSpec((None, IN_PAD, HIDDEN), lambda p, b: (p, 0, 0)),
                pl.BlockSpec((None, 1, HIDDEN), lambda p, b: (p, 0, 0)),
                pl.BlockSpec((None, 6, HIDDEN, HIDDEN), lambda p, b: (p, 0, 0, 0)),
                pl.BlockSpec((None, 6, 1, HIDDEN), lambda p, b: (p, 0, 0, 0)),
                pl.BlockSpec((None, HIDDEN, OUT_PAD), lambda p, b: (p, 0, 0)),
                pl.BlockSpec((None, 1, OUT_PAD), lambda p, b: (p, 0, 0)),
                pl.BlockSpec((None, 7, 1, HIDDEN), lambda p, b: (p, 0, 0, 0)),
            ],
            out_specs=pl.BlockSpec((None, tb, OUT_PAD), lambda p, b: (p, b, 0)),
            compiler_params=pltpu.CompilerParams(
                dimension_semantics=("parallel", "parallel")),
            cost_estimate=cost,
        )(*args)

    leg = out[0, :B, :2 * len(LEG_TW)].reshape(B, len(LEG_TW), 2)
    spine = out[1, :B, :2 * len(SPINE_TW)].reshape(B, len(SPINE_TW), 2)
    arm = out[2, :B, :2 * len(ARM_TW)].reshape(B, len(ARM_TW), 2)
    return arm, spine, leg


if __name__ == "__main__":
    key = jax.random.PRNGKey(0)
    k_inp, k_beta, k_par = jax.random.split(key, 3)
    params = init_params(k_par)

    fwd_grid = jax.jit(functools.partial(smpl_mixik_forward, collapse=False))
    fwd_coll = jax.jit(functools.partial(smpl_mixik_forward, collapse=True))

    # --- tiny-batch latency case: exercise BOTH code paths and cross-check ---
    B = 2
    p3d = jax.random.normal(k_inp, (B, N_JOINTS, 3), jnp.float32)
    beta = jax.random.normal(k_beta, (B, 10), jnp.float32)

    arm_g, spine_g, leg_g = fwd_grid(p3d, beta, params)
    arm_c, spine_c, leg_c = fwd_coll(p3d, beta, params)
    jax.block_until_ready((arm_g, spine_g, leg_g, arm_c, spine_c, leg_c))

    assert arm_g.shape == (B, 8, 2)
    assert spine_g.shape == (B, 3, 2)
    assert leg_g.shape == (B, 6, 2)
    for a, b_ in ((arm_g, arm_c), (spine_g, spine_c), (leg_g, leg_c)):
        assert bool(jnp.all(jnp.isfinite(a)))
        assert bool(jnp.all(jnp.isfinite(b_)))
        assert bool(jnp.allclose(a, b_, rtol=1e-2, atol=1e-2))

    # --- larger batch: exercises the (parts, batch-tile) grid with nb > 1 ---
    B2 = 600
    p3d2 = jax.random.normal(k_inp, (B2, N_JOINTS, 3), jnp.float32)
    beta2 = jax.random.normal(k_beta, (B2, 10), jnp.float32)
    arm2, spine2, leg2 = fwd_grid(p3d2, beta2, params)
    jax.block_until_ready((arm2, spine2, leg2))
    assert arm2.shape == (B2, 8, 2)
    assert spine2.shape == (B2, 3, 2)
    assert leg2.shape == (B2, 6, 2)
    assert bool(jnp.all(jnp.isfinite(arm2)))
    assert bool(jnp.all(jnp.isfinite(spine2)))
    assert bool(jnp.all(jnp.isfinite(leg2)))

    print("KERNEL_OK")
</pallas_src>

<mosaic_0001>
module attributes {stable_mosaic.version = 11 : i64} {
  func.func @_part_kernel(%arg0: i32, %arg1: i32, %arg2: memref<8x128xf32, #tpu.memory_space<vmem>>, %arg3: memref<1x128x256xbf16, #tpu.memory_space<vmem>>, %arg4: memref<1x1x256xf32, #tpu.memory_space<vmem>>, %arg5: memref<1x6x256x256xbf16, #tpu.memory_space<vmem>>, %arg6: memref<1x6x1x256xf32, #tpu.memory_space<vmem>>, %arg7: memref<1x256x128xbf16, #tpu.memory_space<vmem>>, %arg8: memref<1x1x128xf32, #tpu.memory_space<vmem>>, %arg9: memref<1x7x1x256xf32, #tpu.memory_space<vmem>>, %arg10: memref<1x8x128xf32, #tpu.memory_space<vmem>>) attributes {dimension_semantics = [#tpu.dimension_semantics<parallel>, #tpu.dimension_semantics<parallel>], iteration_bounds = array<i64: 3, 1>, scalar_prefetch = 0 : i64, scratch_operands = 0 : i64, tpu.core_type = #tpu.core_type<tc>, window_params = [{transform_indices = @transform_0, window_bounds = array<i64: 8, 128>}, {transform_indices = @transform_1, window_bounds = array<i64: 1, 128, 256>}, {transform_indices = @transform_2, window_bounds = array<i64: 1, 1, 256>}, {transform_indices = @transform_3, window_bounds = array<i64: 1, 6, 256, 256>}, {transform_indices = @transform_4, window_bounds = array<i64: 1, 6, 1, 256>}, {transform_indices = @transform_5, window_bounds = array<i64: 1, 256, 128>}, {transform_indices = @transform_6, window_bounds = array<i64: 1, 1, 128>}, {transform_indices = @transform_7, window_bounds = array<i64: 1, 7, 1, 256>}, {transform_indices = @transform_8, window_bounds = array<i64: 1, 8, 128>}]} {
    %c0 = arith.constant 0 : index
    %c0_0 = arith.constant 0 : index
    %0 = vector.load %arg2[%c0, %c0_0] : memref<8x128xf32, #tpu.memory_space<vmem>>, vector<8x128xf32>
    %1 = arith.truncf %0 : vector<8x128xf32> to vector<8x128xbf16>
    %c0_1 = arith.constant 0 : index
    %c0_2 = arith.constant 0 : index
    %c0_3 = arith.constant 0 : index
    %2 = vector.load %arg3[%c0_1, %c0_2, %c0_3] : memref<1x128x256xbf16, #tpu.memory_space<vmem>>, vector<1x128x256xbf16>
    %3 = vector.shape_cast %2 : vector<1x128x256xbf16> to vector<128x256xbf16>
    %c0_4 = arith.constant 0 : index
    %c0_5 = arith.constant 0 : index
    %c0_6 = arith.constant 0 : index
    %4 = vector.load %arg4[%c0_4, %c0_5, %c0_6] : memref<1x1x256xf32, #tpu.memory_space<vmem>>, vector<1x1x256xf32>
    %5 = vector.shape_cast %4 : vector<1x1x256xf32> to vector<1x256xf32>
    %c0_7 = arith.constant 0 : index
    %c0_8 = arith.constant 0 : index
    %c0_9 = arith.constant 0 : index
    %c0_10 = arith.constant 0 : index
    %6 = vector.load %arg9[%c0_7, %c0_8, %c0_9, %c0_10] : memref<1x7x1x256xf32, #tpu.memory_space<vmem>>, vector<1x1x1x256xf32>
    %7 = vector.shape_cast %6 : vector<1x1x1x256xf32> to vector<1x256xf32>
    %cst = arith.constant dense<0.000000e+00> : vector<8x256xf32>
    %8 = tpu.matmul %1, %3, %cst {dimension_numbers = #tpu.dot_dimension_numbers<[1], [0], [0], [1], [0, 0, 1, 1], [], []>} : vector<8x128xbf16>, vector<128x256xbf16>, vector<8x256xf32> -> vector<8x256xf32>
    %9 = arith.truncf %8 : vector<8x256xf32> to vector<8x256xbf16>
    %10 = arith.truncf %5 : vector<1x256xf32> to vector<1x256xbf16>
    %11 = vector.broadcast %10 : vector<1x256xbf16> to vector<8x256xbf16>
    %12 = arith.addf %9, %11 : vector<8x256xbf16>
    %cst_11 = arith.constant 0.000000e+00 : bf16
    %13 = vector.broadcast %cst_11 : bf16 to vector<8x256xbf16>
    %14 = arith.cmpf ogt, %12, %13 : vector<8x256xbf16>
    %15 = arith.truncf %7 : vector<1x256xf32> to vector<1x256xbf16>
    %16 = vector.broadcast %15 : vector<1x256xbf16> to vector<8x256xbf16>
    %17 = arith.mulf %16, %12 : vector<8x256xbf16>
    %18 = arith.select %14, %12, %17 : vector<8x256xi1>, vector<8x256xbf16>
    %c0_12 = arith.constant 0 : index
    %c0_13 = arith.constant 0 : index
    %c0_14 = arith.constant 0 : index
    %c0_15 = arith.constant 0 : index
    %19 = vector.load %arg5[%c0_12, %c0_13, %c0_14, %c0_15] : memref<1x6x256x256xbf16, #tpu.memory_space<vmem>>, vector<1x1x256x256xbf16>
    %20 = vector.shape_cast %19 : vector<1x1x256x256xbf16> to vector<256x256xbf16>
    %c0_16 = arith.constant 0 : index
    %c0_17 = arith.constant 0 : index
    %c0_18 = arith.constant 0 : index
    %c0_19 = arith.constant 0 : index
    %21 = vector.load %arg6[%c0_16, %c0_17, %c0_18, %c0_19] : memref<1x6x1x256xf32, #tpu.memory_space<vmem>>, vector<1x1x1x256xf32>
    %22 = vector.shape_cast %21 : vector<1x1x1x256xf32> to vector<1x256xf32>
    %c0_20 = arith.constant 0 : index
    %c1 = arith.constant 1 : index
    %c0_21 = arith.constant 0 : index
    %c0_22 = arith.constant 0 : index
    %23 = vector.load %arg9[%c0_20, %c1, %c0_21, %c0_22] : memref<1x7x1x256xf32, #tpu.memory_space<vmem>>, vector<1x1x1x256xf32>
    %24 = vector.shape_cast %23 : vector<1x1x1x256xf32> to vector<1x256xf32>
    %cst_23 = arith.constant dense<0.000000e+00> : vector<8x256xf32>
    %25 = tpu.matmul %18, %20, %cst_23 {dimension_numbers = #tpu.dot_dimension_numbers<[1], [0], [0], [1], [0, 0, 1, 1], [], []>} : vector<8x256xbf16>, vector<256x256xbf16>, vector<8x256xf32> -> vector<8x256xf32>
    %26 = arith.truncf %25 : vector<8x256xf32> to vector<8x256xbf16>
    %27 = arith.truncf %22 : vector<1x256xf32> to vector<1x256xbf16>
    %28 = vector.broadcast %27 : vector<1x256xbf16> to vector<8x256xbf16>
    %29 = arith.addf %26, %28 : vector<8x256xbf16>
    %cst_24 = arith.constant 0.000000e+00 : bf16
    %30 = vector.broadcast %cst_24 : bf16 to vector<8x256xbf16>
    %31 = arith.cmpf ogt, %29, %30 : vector<8x256xbf16>
    %32 = arith.truncf %24 : vector<1x256xf32> to vector<1x256xbf16>
    %33 = vector.broadcast %32 : vector<1x256xbf16> to vector<8x256xbf16>
    %34 = arith.mulf %33, %29 : vector<8x256xbf16>
    %35 = arith.select %31, %29, %34 : vector<8x256xi1>, vector<8x256xbf16>
    %c0_25 = arith.constant 0 : index
    %c1_26 = arith.constant 1 : index
    %c0_27 = arith.constant 0 : index
    %c0_28 = arith.constant 0 : index
    %36 = vector.load %arg5[%c0_25, %c1_26, %c0_27, %c0_28] : memref<1x6x256x256xbf16, #tpu.memory_space<vmem>>, vector<1x1x256x256xbf16>
    %37 = vector.shape_cast %36 : vector<1x1x256x256xbf16> to vector<256x256xbf16>
    %c0_29 = arith.constant 0 : index
    %c1_30 = arith.constant 1 : index
    %c0_31 = arith.constant 0 : index
    %c0_32 = arith.constant 0 : index
    %38 = vector.load %arg6[%c0_29, %c1_30, %c0_31, %c0_32] : memref<1x6x1x256xf32, #tpu.memory_space<vmem>>, vector<1x1x1x256xf32>
    %39 = vector.shape_cast %38 : vector<1x1x1x256xf32> to vector<1x256xf32>
    %c0_33 = arith.constant 0 : index
    %c2 = arith.constant 2 : index
    %c0_34 = arith.constant 0 : index
    %c0_35 = arith.constant 0 : index
    %40 = vector.load %arg9[%c0_33, %c2, %c0_34, %c0_35] : memref<1x7x1x256xf32, #tpu.memory_space<vmem>>, vector<1x1x1x256xf32>
    %41 = vector.shape_cast %40 : vector<1x1x1x256xf32> to vector<1x256xf32>
    %cst_36 = arith.constant dense<0.000000e+00> : vector<8x256xf32>
    %42 = tpu.matmul %35, %37, %cst_36 {dimension_numbers = #tpu.dot_dimension_numbers<[1], [0], [0], [1], [0, 0, 1, 1], [], []>} : vector<8x256xbf16>, vector<256x256xbf16>, vector<8x256xf32> -> vector<8x256xf32>
    %43 = arith.truncf %42 : vector<8x256xf32> to vector<8x256xbf16>
    %44 = arith.truncf %39 : vector<1x256xf32> to vector<1x256xbf16>
    %45 = vector.broadcast %44 : vector<1x256xbf16> to vector<8x256xbf16>
    %46 = arith.addf %43, %45 : vector<8x256xbf16>
    %cst_37 = arith.constant 0.000000e+00 : bf16
    %47 = vector.broadcast %cst_37 : bf16 to vector<8x256xbf16>
    %48 = arith.cmpf ogt, %46, %47 : vector<8x256xbf16>
    %49 = arith.truncf %41 : vector<1x256xf32> to vector<1x256xbf16>
    %50 = vector.broadcast %49 : vector<1x256xbf16> to vector<8x256xbf16>
    %51 = arith.mulf %50, %46 : vector<8x256xbf16>
    %52 = arith.select %48, %46, %51 : vector<8x256xi1>, vector<8x256xbf16>
    %53 = arith.addf %52, %18 : vector<8x256xbf16>
    %c0_38 = arith.constant 0 : index
    %c2_39 = arith.constant 2 : index
    %c0_40 = arith.constant 0 : index
    %c0_41 = arith.constant 0 : index
    %54 = vector.load %arg5[%c0_38, %c2_39, %c0_40, %c0_41] : memref<1x6x256x256xbf16, #tpu.memory_space<vmem>>, vector<1x1x256x256xbf16>
    %55 = vector.shape_cast %54 : vector<1x1x256x256xbf16> to vector<256x256xbf16>
    %c0_42 = arith.constant 0 : index
    %c2_43 = arith.constant 2 : index
    %c0_44 = arith.constant 0 : index
    %c0_45 = arith.constant 0 : index
    %56 = vector.load %arg6[%c0_42, %c2_43, %c0_44, %c0_45] : memref<1x6x1x256xf32, #tpu.memory_space<vmem>>, vector<1x1x1x256xf32>
    %57 = vector.shape_cast %56 : vector<1x1x1x256xf32> to vector<1x256xf32>
    %c0_46 = arith.constant 0 : index
    %c3 = arith.constant 3 : index
    %c0_47 = arith.constant 0 : index
    %c0_48 = arith.constant 0 : index
    %58 = vector.load %arg9[%c0_46, %c3, %c0_47, %c0_48] : memref<1x7x1x256xf32, #tpu.memory_space<vmem>>, vector<1x1x1x256xf32>
    %59 = vector.shape_cast %58 : vector<1x1x1x256xf32> to vector<1x256xf32>
    %cst_49 = arith.constant dense<0.000000e+00> : vector<8x256xf32>
    %60 = tpu.matmul %53, %55, %cst_49 {dimension_numbers = #tpu.dot_dimension_numbers<[1], [0], [0], [1], [0, 0, 1, 1], [], []>} : vector<8x256xbf16>, vector<256x256xbf16>, vector<8x256xf32> -> vector<8x256xf32>
    %61 = arith.truncf %60 : vector<8x256xf32> to vector<8x256xbf16>
    %62 = arith.truncf %57 : vector<1x256xf32> to vector<1x256xbf16>
    %63 = vector.broadcast %62 : vector<1x256xbf16> to vector<8x256xbf16>
    %64 = arith.addf %61, %63 : vector<8x256xbf16>
    %cst_50 = arith.constant 0.000000e+00 : bf16
    %65 = vector.broadcast %cst_50 : bf16 to vector<8x256xbf16>
    %66 = arith.cmpf ogt, %64, %65 : vector<8x256xbf16>
    %67 = arith.truncf %59 : vector<1x256xf32> to vector<1x256xbf16>
    %68 = vector.broadcast %67 : vector<1x256xbf16> to vector<8x256xbf16>
    %69 = arith.mulf %68, %64 : vector<8x256xbf16>
    %70 = arith.select %66, %64, %69 : vector<8x256xi1>, vector<8x256xbf16>
    %c0_51 = arith.constant 0 : index
    %c3_52 = arith.constant 3 : index
    %c0_53 = arith.constant 0 : index
    %c0_54 = arith.constant 0 : index
    %71 = vector.load %arg5[%c0_51, %c3_52, %c0_53, %c0_54] : memref<1x6x256x256xbf16, #tpu.memory_space<vmem>>, vector<1x1x256x256xbf16>
    %72 = vector.shape_cast %71 : vector<1x1x256x256xbf16> to vector<256x256xbf16>
    %c0_55 = arith.constant 0 : index
    %c3_56 = arith.constant 3 : index
    %c0_57 = arith.constant 0 : index
    %c0_58 = arith.constant 0 : index
    %73 = vector.load %arg6[%c0_55, %c3_56, %c0_57, %c0_58] : memref<1x6x1x256xf32, #tpu.memory_space<vmem>>, vector<1x1x1x256xf32>
    %74 = vector.shape_cast %73 : vector<1x1x1x256xf32> to vector<1x256xf32>
    %c0_59 = arith.constant 0 : index
    %c4 = arith.constant 4 : index
    %c0_60 = arith.constant 0 : index
    %c0_61 = arith.constant 0 : index
    %75 = vector.load %arg9[%c0_59, %c4, %c0_60, %c0_61] : memref<1x7x1x256xf32, #tpu.memory_space<vmem>>, vector<1x1x1x256xf32>
    %76 = vector.shape_cast %75 : vector<1x1x1x256xf32> to vector<1x256xf32>
    %cst_62 = arith.constant dense<0.000000e+00> : vector<8x256xf32>
    %77 = tpu.matmul %70, %72, %cst_62 {dimension_numbers = #tpu.dot_dimension_numbers<[1], [0], [0], [1], [0, 0, 1, 1], [], []>} : vector<8x256xbf16>, vector<256x256xbf16>, vector<8x256xf32> -> vector<8x256xf32>
    %78 = arith.truncf %77 : vector<8x256xf32> to vector<8x256xbf16>
    %79 = arith.truncf %74 : vector<1x256xf32> to vector<1x256xbf16>
    %80 = vector.broadcast %79 : vector<1x256xbf16> to vector<8x256xbf16>
    %81 = arith.addf %78, %80 : vector<8x256xbf16>
    %cst_63 = arith.constant 0.000000e+00 : bf16
    %82 = vector.broadcast %cst_63 : bf16 to vector<8x256xbf16>
    %83 = arith.cmpf ogt, %81, %82 : vector<8x256xbf16>
    %84 = arith.truncf %76 : vector<1x256xf32> to vector<1x256xbf16>
    %85 = vector.broadcast %84 : vector<1x256xbf16> to vector<8x256xbf16>
    %86 = arith.mulf %85, %81 : vector<8x256xbf16>
    %87 = arith.select %83, %81, %86 : vector<8x256xi1>, vector<8x256xbf16>
    %88 = arith.addf %87, %53 : vector<8x256xbf16>
    %c0_64 = arith.constant 0 : index
    %c4_65 = arith.constant 4 : index
    %c0_66 = arith.constant 0 : index
    %c0_67 = arith.constant 0 : index
    %89 = vector.load %arg5[%c0_64, %c4_65, %c0_66, %c0_67] : memref<1x6x256x256xbf16, #tpu.memory_space<vmem>>, vector<1x1x256x256xbf16>
    %90 = vector.shape_cast %89 : vector<1x1x256x256xbf16> to vector<256x256xbf16>
    %c0_68 = arith.constant 0 : index
    %c4_69 = arith.constant 4 : index
    %c0_70 = arith.constant 0 : index
    %c0_71 = arith.constant 0 : index
    %91 = vector.load %arg6[%c0_68, %c4_69, %c0_70, %c0_71] : memref<1x6x1x256xf32, #tpu.memory_space<vmem>>, vector<1x1x1x256xf32>
    %92 = vector.shape_cast %91 : vector<1x1x1x256xf32> to vector<1x256xf32>
    %c0_72 = arith.constant 0 : index
    %c5 = arith.constant 5 : index
    %c0_73 = arith.constant 0 : index
    %c0_74 = arith.constant 0 : index
    %93 = vector.load %arg9[%c0_72, %c5, %c0_73, %c0_74] : memref<1x7x1x256xf32, #tpu.memory_space<vmem>>, vector<1x1x1x256xf32>
    %94 = vector.shape_cast %93 : vector<1x1x1x256xf32> to vector<1x256xf32>
    %cst_75 = arith.constant dense<0.000000e+00> : vector<8x256xf32>
    %95 = tpu.matmul %88, %90, %cst_75 {dimension_numbers = #tpu.dot_dimension_numbers<[1], [0], [0], [1], [0, 0, 1, 1], [], []>} : vector<8x256xbf16>, vector<256x256xbf16>, vector<8x256xf32> -> vector<8x256xf32>
    %96 = arith.truncf %95 : vector<8x256xf32> to vector<8x256xbf16>
    %97 = arith.truncf %92 : vector<1x256xf32> to vector<1x256xbf16>
    %98 = vector.broadcast %97 : vector<1x256xbf16> to vector<8x256xbf16>
    %99 = arith.addf %96, %98 : vector<8x256xbf16>
    %cst_76 = arith.constant 0.000000e+00 : bf16
    %100 = vector.broadcast %cst_76 : bf16 to vector<8x256xbf16>
    %101 = arith.cmpf ogt, %99, %100 : vector<8x256xbf16>
    %102 = arith.truncf %94 : vector<1x256xf32> to vector<1x256xbf16>
    %103 = vector.broadcast %102 : vector<1x256xbf16> to vector<8x256xbf16>
    %104 = arith.mulf %103, %99 : vector<8x256xbf16>
    %105 = arith.select %101, %99, %104 : vector<8x256xi1>, vector<8x256xbf16>
    %c0_77 = arith.constant 0 : index
    %c5_78 = arith.constant 5 : index
    %c0_79 = arith.constant 0 : index
    %c0_80 = arith.constant 0 : index
    %106 = vector.load %arg5[%c0_77, %c5_78, %c0_79, %c0_80] : memref<1x6x256x256xbf16, #tpu.memory_space<vmem>>, vector<1x1x256x256xbf16>
    %107 = vector.shape_cast %106 : vector<1x1x256x256xbf16> to vector<256x256xbf16>
    %c0_81 = arith.constant 0 : index
    %c5_82 = arith.constant 5 : index
    %c0_83 = arith.constant 0 : index
    %c0_84 = arith.constant 0 : index
    %108 = vector.load %arg6[%c0_81, %c5_82, %c0_83, %c0_84] : memref<1x6x1x256xf32, #tpu.memory_space<vmem>>, vector<1x1x1x256xf32>
    %109 = vector.shape_cast %108 : vector<1x1x1x256xf32> to vector<1x256xf32>
    %c0_85 = arith.constant 0 : index
    %c6 = arith.constant 6 : index
    %c0_86 = arith.constant 0 : index
    %c0_87 = arith.constant 0 : index
    %110 = vector.load %arg9[%c0_85, %c6, %c0_86, %c0_87] : memref<1x7x1x256xf32, #tpu.memory_space<vmem>>, vector<1x1x1x256xf32>
    %111 = vector.shape_cast %110 : vector<1x1x1x256xf32> to vector<1x256xf32>
    %cst_88 = arith.constant dense<0.000000e+00> : vector<8x256xf32>
    %112 = tpu.matmul %105, %107, %cst_88 {dimension_numbers = #tpu.dot_dimension_numbers<[1], [0], [0], [1], [0, 0, 1, 1], [], []>} : vector<8x256xbf16>, vector<256x256xbf16>, vector<8x256xf32> -> vector<8x256xf32>
    %113 = arith.truncf %112 : vector<8x256xf32> to vector<8x256xbf16>
    %114 = arith.truncf %109 : vector<1x256xf32> to vector<1x256xbf16>
    %115 = vector.broadcast %114 : vector<1x256xbf16> to vector<8x256xbf16>
    %116 = arith.addf %113, %115 : vector<8x256xbf16>
    %cst_89 = arith.constant 0.000000e+00 : bf16
    %117 = vector.broadcast %cst_89 : bf16 to vector<8x256xbf16>
    %118 = arith.cmpf ogt, %116, %117 : vector<8x256xbf16>
    %119 = arith.truncf %111 : vector<1x256xf32> to vector<1x256xbf16>
    %120 = vector.broadcast %119 : vector<1x256xbf16> to vector<8x256xbf16>
    %121 = arith.mulf %120, %116 : vector<8x256xbf16>
    %122 = arith.select %118, %116, %121 : vector<8x256xi1>, vector<8x256xbf16>
    %123 = arith.addf %122, %88 : vector<8x256xbf16>
    %c0_90 = arith.constant 0 : index
    %c0_91 = arith.constant 0 : index
    %c0_92 = arith.constant 0 : index
    %124 = vector.load %arg7[%c0_90, %c0_91, %c0_92] : memref<1x256x128xbf16, #tpu.memory_space<vmem>>, vector<1x256x128xbf16>
    %125 = vector.shape_cast %124 : vector<1x256x128xbf16> to vector<256x128xbf16>
    %cst_93 = arith.constant dense<0.000000e+00> : vector<8x128xf32>
    %126 = tpu.matmul %123, %125, %cst_93 {dimension_numbers = #tpu.dot_dimension_numbers<[1], [0], [0], [1], [0, 0, 1, 1], [], []>} : vector<8x256xbf16>, vector<256x128xbf16>, vector<8x128xf32> -> vector<8x128xf32>
    %c0_94 = arith.constant 0 : index
    %c0_95 = arith.constant 0 : index
    %c0_96 = arith.constant 0 : index
    %127 = vector.load %arg8[%c0_94, %c0_95, %c0_96] : memref<1x1x128xf32, #tpu.memory_space<vmem>>, vector<1x1x128xf32>
    %128 = vector.shape_cast %127 : vector<1x1x128xf32> to vector<1x128xf32>
    %129 = vector.broadcast %128 : vector<1x128xf32> to vector<8x128xf32>
    %130 = arith.addf %126, %129 : vector<8x128xf32>
    %c0_97 = arith.constant 0 : index
    %c0_98 = arith.constant 0 : index
    %c0_99 = arith.constant 0 : index
    %131 = vector.load %arg10[%c0_97, %c0_98, %c0_99] : memref<1x8x128xf32, #tpu.memory_space<vmem>>, vector<1x8x128xf32>
    %132 = vector.shape_cast %131 : vector<1x8x128xf32> to vector<8x128xf32>
    %133 = vector.shape_cast %130 : vector<8x128xf32> to vector<1x8x128xf32>
    tpu.vector_store %arg10[%c0_97, %c0_98, %c0_99], %133 {strides = array<i32>} : memref<1x8x128xf32, #tpu.memory_space<vmem>>, vector<1x8x128xf32>,
    return
  }
  func.func @transform_0(%arg0: i32, %arg1: i32) -> (i32, i32) {
    %c0_i32 = arith.constant 0 : i32
    %c0_i32_0 = arith.constant 0 : i32
    return %arg1, %c0_i32 : i32, i32
  }
  func.func @transform_1(%arg0: i32, %arg1: i32) -> (i32, i32, i32) {
    %c0_i32 = arith.constant 0 : i32
    %c0_i32_0 = arith.constant 0 : i32
    %c0_i32_1 = arith.constant 0 : i32
    return %arg0, %c0_i32, %c0_i32_0 : i32, i32, i32
  }
  func.func @transform_2(%arg0: i32, %arg1: i32) -> (i32, i32, i32) {
    %c0_i32 = arith.constant 0 : i32
    %c0_i32_0 = arith.constant 0 : i32
    %c0_i32_1 = arith.constant 0 : i32
    return %arg0, %c0_i32, %c0_i32_0 : i32, i32, i32
  }
  func.func @transform_3(%arg0: i32, %arg1: i32) -> (i32, i32, i32, i32) {
    %c0_i32 = arith.constant 0 : i32
    %c0_i32_0 = arith.constant 0 : i32
    %c0_i32_1 = arith.constant 0 : i32
    %c0_i32_2 = arith.constant 0 : i32
    return %arg0, %c0_i32, %c0_i32_0, %c0_i32_1 : i32, i32, i32, i32
  }
  func.func @transform_4(%arg0: i32, %arg1: i32) -> (i32, i32, i32, i32) {
    %c0_i32 = arith.constant 0 : i32
    %c0_i32_0 = arith.constant 0 : i32
    %c0_i32_1 = arith.constant 0 : i32
    %c0_i32_2 = arith.constant 0 : i32
    return %arg0, %c0_i32, %c0_i32_0, %c0_i32_1 : i32, i32, i32, i32
  }
  func.func @transform_5(%arg0: i32, %arg1: i32) -> (i32, i32, i32) {
    %c0_i32 = arith.constant 0 : i32
    %c0_i32_0 = arith.constant 0 : i32
    %c0_i32_1 = arith.constant 0 : i32
    return %arg0, %c0_i32, %c0_i32_0 : i32, i32, i32
  }
  func.func @transform_6(%arg0: i32, %arg1: i32) -> (i32, i32, i32) {
    %c0_i32 = arith.constant 0 : i32
    %c0_i32_0 = arith.constant 0 : i32
    %c0_i32_1 = arith.constant 0 : i32
    return %arg0, %c0_i32, %c0_i32_0 : i32, i32, i32
  }
  func.func @transform_7(%arg0: i32, %arg1: i32) -> (i32, i32, i32, i32) {
    %c0_i32 = arith.constant 0 : i32
    %c0_i32_0 = arith.constant 0 : i32
    %c0_i32_1 = arith.constant 0 : i32
    %c0_i32_2 = arith.constant 0 : i32
    return %arg0, %c0_i32, %c0_i32_0, %c0_i32_1 : i32, i32, i32, i32
  }
  func.func @transform_8(%arg0: i32, %arg1: i32) -> (i32, i32, i32) {
    %c0_i32 = arith.constant 0 : i32
    %c0_i32_0 = arith.constant 0 : i32
    return %arg0, %arg1, %c0_i32 : i32, i32, i32
  }
}

</mosaic_0001>

<llo_original>
// kernel: squeeze.4
$region0: #{squeeze.4}
  %s0 = inlined_call_operand.vmem [shape: f32[1,2,6], index: 0, kind: input, shape index: {}]
  %s1 = inlined_call_operand.vmem [shape: f32[2,3,2], index: 1, kind: output, shape index: {}]
  $region1: #{squeeze.4} parent=0
    #allocation0 [shape = 'u8[8192]{0}', space=vmem, size = 0x2000, scoped, tag = 'scoped mem for output reshape']
    #allocation1 [shape = 'u8[4096]{0}', space=vmem, size = 0x1000, scoped, tag = 'scoped mem for input reshape']
    %s3 = sshllo.u32 0, 2
    %v4 = vld [vmem:[%s0] sm:%s3]
    %5 = vst [vmem:[#allocation1] sm:%s3] %v4
    %v6 = vld [vmem:[#allocation1] sm:$0x3]
    %vm7 = vcmask 15360
    %8 = vst.msk [vmem:[#allocation0] ss:$8 sm:$0x3] %vm7, %v6
    %v9 = vld [vmem:[#allocation1] sm:$0x3]
    %10 = vrot.lane.b32.xlu0 %v9, 126
    %v11 = vpop.permute.xlu0 %10
    %vm12 = vcmask 15360
    %s13 = scalar_lea.vmem [#allocation0], 1
    %14 = vst.msk [vmem:[%s13] ss:$8 sm:$0x3] %vm12, %v11
    %v15 = vld [vmem:[#allocation1] sm:$0x3]
    %16 = vrot.lane.b32.xlu0 %v15, 124
    %v17 = vpop.permute.xlu0 %16
    %vm18 = vcmask 15360
    %s19 = scalar_lea.vmem [#allocation0], 2
    %20 = vst.msk [vmem:[%s19] ss:$8 sm:$0x3] %vm18, %v17
    %s22 = sshllo.u32 0, 4
    %v24 = vld [vmem:[#allocation0] sm:%s22]
    %s25 = sshllo.u32 0, 4
    %26 = vst [vmem:[%s1] sm:%s25] %v24
    %s27 = scalar_lea.vmem [#allocation0], 8
    %v28 = vld [vmem:[%s27] sm:%s22]
    %s29 = sshllo.u32 0, 4
    %s30 = scalar_lea.vmem %s1, 4
    %31 = vst [vmem:[%s30] sm:%s29] %v28

// kernel: squeeze.5
$region0: #{squeeze.5}
  %s0 = inlined_call_operand.vmem [shape: f32[1,2,16], index: 0, kind: input, shape index: {}]
  %s1 = inlined_call_operand.vmem [shape: f32[2,8,2], index: 1, kind: output, shape index: {}]
  $region1: #{squeeze.5} parent=0
    #allocation0 [shape = 'u8[4096]{0}', space=vmem, size = 0x1000, scoped, tag = 'scoped mem for input reshape']
    %s3 = sshllo.u32 0, 2
    %v4 = vld [vmem:[%s0] sm:%s3]
    %5 = vst [vmem:[#allocation0] sm:%s3] %v4
    %v6 = vld [vmem:[#allocation0] sm:$0x3]
    %vm7 = vcmask 15360
    %8 = vst.msk [vmem:[%s1] ss:$8 sm:$0x3] %vm7, %v6
    %v9 = vld [vmem:[#allocation0] sm:$0x3]
    %10 = vrot.lane.b32.xlu0 %v9, 126
    %v11 = vpop.permute.xlu0 %10
    %vm12 = vcmask 15360
    %s13 = scalar_lea.vmem %s1, 1
    %14 = vst.msk [vmem:[%s13] ss:$8 sm:$0x3] %vm12, %v11
    %v15 = vld [vmem:[#allocation0] sm:$0x3]
    %16 = vrot.lane.b32.xlu0 %v15, 124
    %v17 = vpop.permute.xlu0 %16
    %vm18 = vcmask 15360
    %s19 = scalar_lea.vmem %s1, 2
    %20 = vst.msk [vmem:[%s19] ss:$8 sm:$0x3] %vm18, %v17
    %v21 = vld [vmem:[#allocation0] sm:$0x3]
    %22 = vrot.lane.b32.xlu0 %v21, 122
    %v23 = vpop.permute.xlu0 %22
    %vm24 = vcmask 15360
    %s25 = scalar_lea.vmem %s1, 3
    %26 = vst.msk [vmem:[%s25] ss:$8 sm:$0x3] %vm24, %v23
    %v27 = vld [vmem:[#allocation0] sm:$0x3]
    %28 = vrot.lane.b32.xlu0 %v27, 120
    %v29 = vpop.permute.xlu0 %28
    %vm30 = vcmask 15360
    %s31 = scalar_lea.vmem %s1, 4
    %32 = vst.msk [vmem:[%s31] ss:$8 sm:$0x3] %vm30, %v29
    %v33 = vld [vmem:[#allocation0] sm:$0x3]
    %34 = vrot.lane.b32.xlu0 %v33, 118
    %v35 = vpop.permute.xlu0 %34
    %vm36 = vcmask 15360
    %s37 = scalar_lea.vmem %s1, 5
    %38 = vst.msk [vmem:[%s37] ss:$8 sm:$0x3] %vm36, %v35
    %v39 = vld [vmem:[#allocation0] sm:$0x3]
    %40 = vrot.lane.b32.xlu0 %v39, 116
    %v41 = vpop.permute.xlu0 %40
    %vm42 = vcmask 15360
    %s43 = scalar_lea.vmem %s1, 6
    %44 = vst.msk [vmem:[%s43] ss:$8 sm:$0x3] %vm42, %v41
    %v45 = vld [vmem:[#allocation0] sm:$0x3]
    %46 = vrot.lane.b32.xlu0 %v45, 114
    %v47 = vpop.permute.xlu0 %46
    %vm48 = vcmask 15360
    %s49 = scalar_lea.vmem %s1, 7
    %50 = vst.msk [vmem:[%s49] ss:$8 sm:$0x3] %vm48, %v47

// kernel: squeeze.3
$region0: #{squeeze.3}
  %s0 = inlined_call_operand.vmem [shape: f32[1,2,12], index: 0, kind: input, shape index: {}]
  %s1 = inlined_call_operand.vmem [shape: f32[2,6,2], index: 1, kind: output, shape index: {}]
  $region1: #{squeeze.3} parent=0
    #allocation0 [shape = 'u8[4096]{0}', space=vmem, size = 0x1000, scoped, tag = 'scoped mem for input reshape']
    %s3 = sshllo.u32 0, 2
    %v4 = vld [vmem:[%s0] sm:%s3]
    %5 = vst [vmem:[#allocation0] sm:%s3] %v4
    %v6 = vld [vmem:[#allocation0] sm:$0x3]
    %vm7 = vcmask 15360
    %8 = vst.msk [vmem:[%s1] ss:$8 sm:$0x3] %vm7, %v6
    %v9 = vld [vmem:[#allocation0] sm:$0x3]
    %10 = vrot.lane.b32.xlu0 %v9, 126
    %v11 = vpop.permute.xlu0 %10
    %vm12 = vcmask 15360
    %s13 = scalar_lea.vmem %s1, 1
    %14 = vst.msk [vmem:[%s13] ss:$8 sm:$0x3] %vm12, %v11
    %v15 = vld [vmem:[#allocation0] sm:$0x3]
    %16 = vrot.lane.b32.xlu0 %v15, 124
    %v17 = vpop.permute.xlu0 %16
    %vm18 = vcmask 15360
    %s19 = scalar_lea.vmem %s1, 2
    %20 = vst.msk [vmem:[%s19] ss:$8 sm:$0x3] %vm18, %v17
    %v21 = vld [vmem:[#allocation0] sm:$0x3]
    %22 = vrot.lane.b32.xlu0 %v21, 122
    %v23 = vpop.permute.xlu0 %22
    %vm24 = vcmask 15360
    %s25 = scalar_lea.vmem %s1, 3
    %26 = vst.msk [vmem:[%s25] ss:$8 sm:$0x3] %vm24, %v23
    %v27 = vld [vmem:[#allocation0] sm:$0x3]
    %28 = vrot.lane.b32.xlu0 %v27, 120
    %v29 = vpop.permute.xlu0 %28
    %vm30 = vcmask 15360
    %s31 = scalar_lea.vmem %s1, 4
    %32 = vst.msk [vmem:[%s31] ss:$8 sm:$0x3] %vm30, %v29
    %v33 = vld [vmem:[#allocation0] sm:$0x3]
    %34 = vrot.lane.b32.xlu0 %v33, 118
    %v35 = vpop.permute.xlu0 %34
    %vm36 = vcmask 15360
    %s37 = scalar_lea.vmem %s1, 5
    %38 = vst.msk [vmem:[%s37] ss:$8 sm:$0x3] %vm36, %v35

// kernel: smpl_mixik_forward.1
$region0: #{smpl_mixik_forward.1}
  #allocation0 [shape = 'u32[]', space=smem, size = 0x4, offset = 0x4, fixed_abs, tag = 'smem constant byte address 0x4 - core index']
  #allocation1 [shape = 'u32[144,128]{1,0:T(1,128)}', space=vmem, size = 0x12000, scoped, tag = 'internal scratch']
  %s0 = inlined_call_operand.vmem [shape: f32[8,128], index: 0, kind: input, shape index: {}]
  %s1 = inlined_call_operand.hbm [shape: bf16[3,128,256], index: 1, kind: input, shape index: {}]
  %s2 = inlined_call_operand.hbm [shape: f32[3,1,256], index: 2, kind: input, shape index: {}]
  %s3 = inlined_call_operand.hbm [shape: bf16[3,6,256,256], index: 3, kind: input, shape index: {}]
  %s4 = inlined_call_operand.hbm [shape: f32[3,6,1,256], index: 4, kind: input, shape index: {}]
  %s5 = inlined_call_operand.hbm [shape: bf16[3,256,128], index: 5, kind: input, shape index: {}]
  %s6 = inlined_call_operand.hbm [shape: f32[3,1,128], index: 6, kind: input, shape index: {}]
  %s7 = inlined_call_operand.hbm [shape: f32[3,7,1,256], index: 7, kind: input, shape index: {}]
  %s8 = inlined_call_operand.vmem [shape: f32[3,8,128], index: 8, kind: output, shape index: {}]
  %s9 = sld [smem:[#allocation0]]
  $region93: #{smpl_mixik_forward.1} parent=0
    _
  %s11 = ssub.s32 1, %s9
  %s12 = scalar_select 0, %s11, %s9
  $region1: #{smpl_mixik_forward.1} parent=0
    #allocation2 [shape = 'u8[131072]{0}', space=vmem, size = 0x20000, scoped, tag = 'input window, operand 1']
    #allocation3 [shape = 's32[2]{0}', space=sflag, size = 0x8, scoped, tag = 'scoped memory for smpl_mixik_forward.1']
    #allocation4 [shape = 'u8[2048]{0}', space=vmem, size = 0x800, scoped, tag = 'input window, operand 2']
    #allocation5 [shape = 's32[2]{0}', space=sflag, size = 0x8, scoped, tag = 'scoped memory for smpl_mixik_forward.1']
    #allocation6 [shape = 'u8[1572864]{0}', space=vmem, size = 0x180000, scoped, tag = 'input window, operand 3']
    #allocation7 [shape = 'u8[12288]{0}', space=vmem, size = 0x3000, scoped, tag = 'input window, operand 4']
    #allocation8 [shape = 's32[2]{0}', space=sflag, size = 0x8, scoped, tag = 'scoped memory for smpl_mixik_forward.1']
    #allocation9 [shape = 'u8[131072]{0}', space=vmem, size = 0x20000, scoped, tag = 'input window, operand 5']
    #allocation10 [shape = 'u8[1024]{0}', space=vmem, size = 0x400, scoped, tag = 'input window, operand 6']
    #allocation11 [shape = 's32[2]{0}', space=sflag, size = 0x8, scoped, tag = 'scoped memory for smpl_mixik_forward.1']
    #allocation12 [shape = 'u8[14336]{0}', space=vmem, size = 0x3800, scoped, tag = 'input window, operand 7']
    %13 = vsyncpa [#allocation3], 0
    %s14 = scalar_lea.sflag [#allocation3], 1
    %15 = vsyncpa %s14, 0
    %16 = vsyncpa [#allocation5], 0
    %s17 = scalar_lea.sflag [#allocation5], 1
    %18 = vsyncpa %s17, 0
    %19 = vsyncpa [#allocation8], 0
    %s20 = scalar_lea.sflag [#allocation8], 1
    %21 = vsyncpa %s20, 0
    %22 = vsyncpa [#allocation11], 0
    %s23 = scalar_lea.sflag [#allocation11], 1
    %24 = vsyncpa %s23, 0
    loop: start=0, step=1, limit=5
    $region2: #{smpl_mixik_forward.1} parent=1 // loop_pre_header
      _
    $region3: #{smpl_mixik_forward.1} parent=1 // loop_header
      %s26 = sphi 0, %s30
      %p27 = scmp.ge.s32.totalorder %s26, 5
      %s33 = sphi 0, %s45
      %s34 = sphi 0, %s41
      %s35 = sphi 0, %s33
      %s36 = sphi 0, %s34
      %s37 = sphi 0, %s35
      %s38 = sphi 0, %s36
      %s48 = sphi 0, %s50
      %s51 = sphi 0, %s48
      %s52 = sphi 0, %s51
      %s68 = sphi 0, %s52
      %s74 = sphi 0, %s76
      %s77 = sphi 0, %s74
      %s78 = sphi 0, %s77
      %s94 = sphi 0, %s78
      %s100 = sphi 0, %s102
      %s103 = sphi 0, %s100
      %s104 = sphi 0, %s103
      %s120 = sphi 0, %s104
      %s126 = sphi 0, %s128
      %s129 = sphi 0, %s126
      %s130 = sphi 0, %s129
      %s146 = sphi 0, %s130
      %s152 = sphi 0, %s154
      %s155 = sphi 0, %s152
      %s156 = sphi 0, %s155
      %s172 = sphi 0, %s156
      %s178 = sphi 0, %s180
      %s181 = sphi 0, %s178
      %s182 = sphi 0, %s181
      %s198 = sphi 0, %s182
      %s204 = sphi 0, %s206
      %s207 = sphi 0, %s204
      %s208 = sphi 0, %s207
      %s224 = sphi 0, %s208
      %s230 = sphi 0, %s232
      %s233 = sphi 0, %s230
      %s234 = sphi 0, %s233
      %s250 = sphi 0, %s234
      %s258 = sphi 0, %s260
      %s261 = sphi 0, %s258
      %s262 = sphi 0, %s261
      %s278 = sphi 0, %s262
    $region4: #{smpl_mixik_forward.1} parent=1 // loop_header_branch
      %29 = sbr.rel (%p27) target = $region8
    $region5: #{smpl_mixik_forward.1} parent=1 // loop_body
      %s31 = ssub.s32 %s26, 1
      %s32 = ssub.s32 %s26, 2
      %s39 = sadd.s32 1, %s34
      %p40 = scmp.ge.s32.totalorder %s39, 1
      %s41 = scalar_select %p40, 0, %s39
      %s42 = sadd.s32 1, %s33
      %s43 = scalar_select %p40, %s42, %s33
      %p44 = scmp.ge.s32.totalorder %s43, 3
      %s45 = scalar_select %p44, 0, %s43
      %s46 = ssub.s32 %s34, %s41
      %p47 = scmp.eq.s32.totalorder %s46, 0
      %s49 = sadd.s32 %s48, 1
      %s50 = scalar_select %p47, %s48, %s49
      %p53 = pneg %p47
      %p54 = scmp.eq.s32.totalorder %s26, 2
      %p55 = por %p53, %p54
      %p56 = scmp.ne.s32.totalorder %s48, %s51
      %p57 = scmp.eq.s32.totalorder %s26, 0
      %p58 = por %p56, %p57
      %p59 = scmp.ne.s32.totalorder %s48, %s51
      %p60 = scmp.eq.s32.totalorder %s31, 2
      %p61 = por %p59, %p60
      %p62 = scmp.ne.s32.totalorder %s51, %s52
      %p63 = scmp.eq.s32.totalorder %s31, 0
      %p64 = por %p62, %p63
      %p65 = scmp.ne.s32.totalorder %s51, %s52
      %p66 = scmp.eq.s32.totalorder %s32, 2
      %p67 = por %p65, %p66
      %p69 = scmp.ne.s32.totalorder %s52, %s68
      %p70 = scmp.eq.s32.totalorder %s32, 0
      %p71 = por %p69, %p70
      %s72 = ssub.s32 %s33, %s45
      %p73 = scmp.eq.s32.totalorder %s72, 0
      %s75 = sadd.s32 %s74, 1
      %s76 = scalar_select %p73, %s74, %s75
      %p79 = pneg %p73
      %p80 = scmp.eq.s32.totalorder %s26, 2
      %p81 = por %p79, %p80
      %p82 = scmp.ne.s32.totalorder %s74, %s77
      %p83 = scmp.eq.s32.totalorder %s26, 0
      %p84 = por %p82, %p83
      %p85 = scmp.ne.s32.totalorder %s74, %s77
      %p86 = scmp.eq.s32.totalorder %s31, 2
      %p87 = por %p85, %p86
      %p88 = scmp.ne.s32.totalorder %s77, %s78
      %p89 = scmp.eq.s32.totalorder %s31, 0
      %p90 = por %p88, %p89
      %p91 = scmp.ne.s32.totalorder %s77, %s78
      %p92 = scmp.eq.s32.totalorder %s32, 2
      %p93 = por %p91, %p92
      %p95 = scmp.ne.s32.totalorder %s78, %s94
      %p96 = scmp.eq.s32.totalorder %s32, 0
      %p97 = por %p95, %p96
      %s98 = ssub.s32 %s33, %s45
      %p99 = scmp.eq.s32.totalorder %s98, 0
      %s101 = sadd.s32 %s100, 1
      %s102 = scalar_select %p99, %s100, %s101
      %p105 = pneg %p99
      %p106 = scmp.eq.s32.totalorder %s26, 2
      %p107 = por %p105, %p106
      %p108 = scmp.ne.s32.totalorder %s100, %s103
      %p109 = scmp.eq.s32.totalorder %s26, 0
      %p110 = por %p108, %p109
      %p111 = scmp.ne.s32.totalorder %s100, %s103
      %p112 = scmp.eq.s32.totalorder %s31, 2
      %p113 = por %p111, %p112
      %p114 = scmp.ne.s32.totalorder %s103, %s104
      %p115 = scmp.eq.s32.totalorder %s31, 0
      %p116 = por %p114, %p115
      %p117 = scmp.ne.s32.totalorder %s103, %s104
      %p118 = scmp.eq.s32.totalorder %s32, 2
      %p119 = por %p117, %p118
      %p121 = scmp.ne.s32.totalorder %s104, %s120
      %p122 = scmp.eq.s32.totalorder %s32, 0
      %p123 = por %p121, %p122
      %s124 = ssub.s32 %s33, %s45
      %p125 = scmp.eq.s32.totalorder %s124, 0
      %s127 = sadd.s32 %s126, 1
      %s128 = scalar_select %p125, %s126, %s127
      %p131 = pneg %p125
      %p132 = scmp.eq.s32.totalorder %s26, 2
      %p133 = por %p131, %p132
      %p134 = scmp.ne.s32.totalorder %s126, %s129
      %p135 = scmp.eq.s32.totalorder %s26, 0
      %p136 = por %p134, %p135
      %p137 = scmp.ne.s32.totalorder %s126, %s129
      %p138 = scmp.eq.s32.totalorder %s31, 2
      %p139 = por %p137, %p138
      %p140 = scmp.ne.s32.totalorder %s129, %s130
      %p141 = scmp.eq.s32.totalorder %s31, 0
      %p142 = por %p140, %p141
      %p143 = scmp.ne.s32.totalorder %s129, %s130
      %p144 = scmp.eq.s32.totalorder %s32, 2
      %p145 = por %p143, %p144
      %p147 = scmp.ne.s32.totalorder %s130, %s146
      %p148 = scmp.eq.s32.totalorder %s32, 0
      %p149 = por %p147, %p148
      %s150 = ssub.s32 %s33, %s45
      %p151 = scmp.eq.s32.totalorder %s150, 0
      %s153 = sadd.s32 %s152, 1
      %s154 = scalar_select %p151, %s152, %s153
      %p157 = pneg %p151
      %p158 = scmp.eq.s32.totalorder %s26, 2
      %p159 = por %p157, %p158
      %p160 = scmp.ne.s32.totalorder %s152, %s155
      %p161 = scmp.eq.s32.totalorder %s26, 0
      %p162 = por %p160, %p161
      %p163 = scmp.ne.s32.totalorder %s152, %s155
      %p164 = scmp.eq.s32.totalorder %s31, 2
      %p165 = por %p163, %p164
      %p166 = scmp.ne.s32.totalorder %s155, %s156
      %p167 = scmp.eq.s32.totalorder %s31, 0
      %p168 = por %p166, %p167
      %p169 = scmp.ne.s32.totalorder %s155, %s156
      %p170 = scmp.eq.s32.totalorder %s32, 2
      %p171 = por %p169, %p170
      %p173 = scmp.ne.s32.totalorder %s156, %s172
      %p174 = scmp.eq.s32.totalorder %s32, 0
      %p175 = por %p173, %p174
      %s176 = ssub.s32 %s33, %s45
      %p177 = scmp.eq.s32.totalorder %s176, 0
      %s179 = sadd.s32 %s178, 1
      %s180 = scalar_select %p177, %s178, %s179
      %p183 = pneg %p177
      %p184 = scmp.eq.s32.totalorder %s26, 2
      %p185 = por %p183, %p184
      %p186 = scmp.ne.s32.totalorder %s178, %s181
      %p187 = scmp.eq.s32.totalorder %s26, 0
      %p188 = por %p186, %p187
      %p189 = scmp.ne.s32.totalorder %s178, %s181
      %p190 = scmp.eq.s32.totalorder %s31, 2
      %p191 = por %p189, %p190
      %p192 = scmp.ne.s32.totalorder %s181, %s182
      %p193 = scmp.eq.s32.totalorder %s31, 0
      %p194 = por %p192, %p193
      %p195 = scmp.ne.s32.totalorder %s181, %s182
      %p196 = scmp.eq.s32.totalorder %s32, 2
      %p197 = por %p195, %p196
      %p199 = scmp.ne.s32.totalorder %s182, %s198
      %p200 = scmp.eq.s32.totalorder %s32, 0
      %p201 = por %p199, %p200
      %s202 = ssub.s32 %s33, %s45
      %p203 = scmp.eq.s32.totalorder %s202, 0
      %s205 = sadd.s32 %s204, 1
      %s206 = scalar_select %p203, %s204, %s205
      %p209 = pneg %p203
      %p210 = scmp.eq.s32.totalorder %s26, 2
      %p211 = por %p209, %p210
      %p212 = scmp.ne.s32.totalorder %s204, %s207
      %p213 = scmp.eq.s32.totalorder %s26, 0
      %p214 = por %p212, %p213
      %p215 = scmp.ne.s32.totalorder %s204, %s207
      %p216 = scmp.eq.s32.totalorder %s31, 2
      %p217 = por %p215, %p216
      %p218 = scmp.ne.s32.totalorder %s207, %s208
      %p219 = scmp.eq.s32.totalorder %s31, 0
      %p220 = por %p218, %p219
      %p221 = scmp.ne.s32.totalorder %s207, %s208
      %p222 = scmp.eq.s32.totalorder %s32, 2
      %p223 = por %p221, %p222
      %p225 = scmp.ne.s32.totalorder %s208, %s224
      %p226 = scmp.eq.s32.totalorder %s32, 0
      %p227 = por %p225, %p226
      %s228 = ssub.s32 %s33, %s45
      %p229 = scmp.eq.s32.totalorder %s228, 0
      %s231 = sadd.s32 %s230, 1
      %s232 = scalar_select %p229, %s230, %s231
      %p235 = pneg %p229
      %p236 = scmp.eq.s32.totalorder %s26, 2
      %p237 = por %p235, %p236
      %p238 = scmp.ne.s32.totalorder %s230, %s233
      %p239 = scmp.eq.s32.totalorder %s26, 0
      %p240 = por %p238, %p239
      %p241 = scmp.ne.s32.totalorder %s230, %s233
      %p242 = scmp.eq.s32.totalorder %s31, 2
      %p243 = por %p241, %p242
      %p244 = scmp.ne.s32.totalorder %s233, %s234
      %p245 = scmp.eq.s32.totalorder %s31, 0
      %p246 = por %p244, %p245
      %p247 = scmp.ne.s32.totalorder %s233, %s234
      %p248 = scmp.eq.s32.totalorder %s32, 2
      %p249 = por %p247, %p248
      %p251 = scmp.ne.s32.totalorder %s234, %s250
      %p252 = scmp.eq.s32.totalorder %s32, 0
      %p253 = por %p251, %p252
      %s254 = ssub.s32 %s33, %s45
      %s255 = ssub.s32 %s34, %s41
      %s256 = sor.u32 %s254, %s255
      %p257 = scmp.eq.s32.totalorder %s256, 0
      %s259 = sadd.s32 %s258, 1
      %s260 = scalar_select %p257, %s258, %s259
      %p263 = pneg %p257
      %p264 = scmp.eq.s32.totalorder %s26, 2
      %p265 = por %p263, %p264
      %p266 = scmp.ne.s32.totalorder %s258, %s261
      %p267 = scmp.eq.s32.totalorder %s26, 0
      %p268 = por %p266, %p267
      %p269 = scmp.ne.s32.totalorder %s258, %s261
      %p270 = scmp.eq.s32.totalorder %s31, 2
      %p271 = por %p269, %p270
      %p272 = scmp.ne.s32.totalorder %s261, %s262
      %p273 = scmp.eq.s32.totalorder %s31, 0
      %p274 = por %p272, %p273
      %p275 = scmp.ne.s32.totalorder %s261, %s262
      %p276 = scmp.eq.s32.totalorder %s32, 2
      %p277 = por %p275, %p276
      %p279 = scmp.ne.s32.totalorder %s262, %s278
      %p280 = scmp.eq.s32.totalorder %s32, 0
      %p281 = por %p279, %p280
      %p282 = scmp.le.s32.totalorder 1, %s26
      %p283 = scmp.lt.s32.totalorder %s26, 4
      %p284 = pnand %p282, %p283
      %p285 = pneg %p284
      // Predicated region
      $region9: #{smpl_mixik_forward.1} parent=5 // pred_check
        _
      $region10: #{smpl_mixik_forward.1} parent=5 // pred_check_branch
        %287 = sbr.rel (%p284) target = $region12
      $region11: #{smpl_mixik_forward.1} parent=5 // pred_region
        %s288 = ssub.s32 %s26, 1
        // Predicated region
        $region13: #{smpl_mixik_forward.1} parent=11 // pred_check
          %p289 = pneg %p64
        $region14: #{smpl_mixik_forward.1} parent=11 // pred_check_branch
          %291 = sbr.rel (%p289) target = $region16
        $region15: #{smpl_mixik_forward.1} parent=11 // pred_region
          %p292 = scmp.lt.s32.totalorder %s36, 0
          %s293 = scalar_select %p292, %s36, 0
          %s294 = smul.addr %s293, 8
          %s295 = scalar_lea.vmem %s0, %s294
        $region16: #{smpl_mixik_forward.1} parent=11 // pred_fallthru
          _
      $region12: #{smpl_mixik_forward.1} parent=5 // pred_fallthru
        _
      %p296 = scmp.lt.s32.totalorder %s26, 3
      // Predicated region
      $region17: #{smpl_mixik_forward.1} parent=5 // pred_check
        %p297 = pneg %p296
      $region18: #{smpl_mixik_forward.1} parent=5 // pred_check_branch
        %299 = sbr.rel (%p297) target = $region20
      $region19: #{smpl_mixik_forward.1} parent=5 // pred_region
        // Predicated region
        $region21: #{smpl_mixik_forward.1} parent=19 // pred_check
          %p300 = pneg %p84
        $region22: #{smpl_mixik_forward.1} parent=19 // pred_check_branch
          %302 = sbr.rel (%p300) target = $region24
        $region23: #{smpl_mixik_forward.1} parent=19 // pred_region
          %s303 = sand.u32 %s74, 1
          %s304 = scalar_lea.sflag [#allocation3], %s303
          %s305 = sand.u32 %s74, 1
          %s306 = smul.addr %s305, 128
          %s307 = scalar_lea.vmem [#allocation2], %s306
          %s309 = ssub.s32 2048, 2048
          %310 = vsyncadd %s304, %s309
          %s311 = smul.addr %s33, 32
          %s312 = smul.addr %s311, 64
          %s313 = scalar_lea.hbm %s1, %s312
          %s314 = sshll.u32 %s307, 4
          %s315 = int_to_ptr.vmem [resolvable:$true] %s314
          %320 = dma.hbm_to_vmem [thread:$0]  %s313, 2048, %s315, %s304, 128, 128, 8
        $region24: #{smpl_mixik_forward.1} parent=19 // pred_fallthru
          _
        // Predicated region
        $region25: #{smpl_mixik_forward.1} parent=19 // pred_check
          %p321 = pneg %p110
        $region26: #{smpl_mixik_forward.1} parent=19 // pred_check_branch
          %323 = sbr.rel (%p321) target = $region28
        $region27: #{smpl_mixik_forward.1} parent=19 // pred_region
          %s324 = sand.u32 %s26, 1
          %s325 = scalar_lea.sflag [#allocation5], %s324
          %s326 = sand.u32 %s100, 1
          %s327 = smul.addr %s326, 2
          %s328 = scalar_lea.vmem [#allocation4], %s327
          %s330 = ssub.s32 32, 32
          %331 = vsyncadd %s325, %s330
          %s332 = smul.addr %s33, 2
          %s333 = smul.addr %s332, 16
          %s334 = scalar_lea.hbm %s2, %s333
          %s336 = sshll.u32 %s328, 4
          %s337 = int_to_ptr.vmem [resolvable:$true] %s336
          %339 = dma.hbm_to_vmem [thread:$0]  %s334, 32, %s337, %s325
        $region28: #{smpl_mixik_forward.1} parent=19 // pred_fallthru
          _
        // Predicated region
        $region29: #{smpl_mixik_forward.1} parent=19 // pred_check
          %p340 = pneg %p136
        $region30: #{smpl_mixik_forward.1} parent=19 // pred_check_branch
          %342 = sbr.rel (%p340) target = $region32
        $region31: #{smpl_mixik_forward.1} parent=19 // pred_region
          %s343 = sand.u32 %s26, 1
          %s344 = scalar_lea.sflag [#allocation5], %s343
          %s345 = sand.u32 %s126, 1
          %s346 = smul.addr %s345, 1536
          %s347 = scalar_lea.vmem [#allocation6], %s346
          %s349 = ssub.s32 24576, 24576
          %350 = vsyncadd %s344, %s349
          %s351 = smul.addr %s33, 384
          %s352 = smul.addr %s351, 64
          %s353 = scalar_lea.hbm %s3, %s352
          %s354 = sshll.u32 %s347, 4
          %s355 = int_to_ptr.vmem [resolvable:$true] %s354
          %360 = dma.hbm_to_vmem [thread:$0]  %s353, 24576, %s355, %s344, 128, 128, 8
        $region32: #{smpl_mixik_forward.1} parent=19 // pred_fallthru
          _
        // Predicated region
        $region33: #{smpl_mixik_forward.1} parent=19 // pred_check
          %p361 = pneg %p162
        $region34: #{smpl_mixik_forward.1} parent=19 // pred_check_branch
          %363 = sbr.rel (%p361) target = $region36
        $region35: #{smpl_mixik_forward.1} parent=19 // pred_region
          %s364 = sand.u32 %s26, 1
          %s365 = scalar_lea.sflag [#allocation8], %s364
          %s366 = sand.u32 %s152, 1
          %s367 = smul.addr %s366, 12
          %s368 = scalar_lea.vmem [#allocation7], %s367
          %s370 = ssub.s32 192, 192
          %371 = vsyncadd %s365, %s370
          %s372 = smul.addr %s33, 12
          %s373 = smul.addr %s372, 16
          %s374 = scalar_lea.hbm %s4, %s373
          %s375 = sshll.u32 %s368, 4
          %s376 = int_to_ptr.vmem [resolvable:$true] %s375
          %381 = dma.hbm_to_vmem [thread:$0]  %s374, 192, %s376, %s365, 32, 32, 2
        $region36: #{smpl_mixik_forward.1} parent=19 // pred_fallthru
          _
        // Predicated region
        $region37: #{smpl_mixik_forward.1} parent=19 // pred_check
          %p382 = pneg %p188
        $region38: #{smpl_mixik_forward.1} parent=19 // pred_check_branch
          %384 = sbr.rel (%p382) target = $region40
        $region39: #{smpl_mixik_forward.1} parent=19 // pred_region
          %s385 = sand.u32 %s26, 1
          %s386 = scalar_lea.sflag [#allocation8], %s385
          %s387 = sand.u32 %s178, 1
          %s388 = smul.addr %s387, 128
          %s389 = scalar_lea.vmem [#allocation9], %s388
          %s391 = ssub.s32 2048, 2048
          %392 = vsyncadd %s386, %s391
          %s393 = smul.addr %s33, 32
          %s394 = smul.addr %s393, 64
          %s395 = scalar_lea.hbm %s5, %s394
          %s396 = sshll.u32 %s389, 4
          %s397 = int_to_ptr.vmem [resolvable:$true] %s396
          %402 = dma.hbm_to_vmem [thread:$0]  %s395, 2048, %s397, %s386, 64, 64, 4
        $region40: #{smpl_mixik_forward.1} parent=19 // pred_fallthru
          _
        // Predicated region
        $region41: #{smpl_mixik_forward.1} parent=19 // pred_check
          %p403 = pneg %p214
        $region42: #{smpl_mixik_forward.1} parent=19 // pred_check_branch
          %405 = sbr.rel (%p403) target = $region44
        $region43: #{smpl_mixik_forward.1} parent=19 // pred_region
          %s406 = sand.u32 %s26, 1
          %s407 = scalar_lea.sflag [#allocation11], %s406
          %s408 = sand.u32 %s204, 1
          %s409 = scalar_lea.vmem [#allocation10], %s408
          %s411 = ssub.s32 16, 16
          %412 = vsyncadd %s407, %s411
          %s413 = smul.addr %s33, 16
          %s414 = scalar_lea.hbm %s6, %s413
          %s416 = sshll.u32 %s409, 4
          %s417 = int_to_ptr.vmem [resolvable:$true] %s416
          %419 = dma.hbm_to_vmem [thread:$0]  %s414, 16, %s417, %s407
        $region44: #{smpl_mixik_forward.1} parent=19 // pred_fallthru
          _
        // Predicated region
        $region45: #{smpl_mixik_forward.1} parent=19 // pred_check
          %p420 = pneg %p240
        $region46: #{smpl_mixik_forward.1} parent=19 // pred_check_branch
          %422 = sbr.rel (%p420) target = $region48
        $region47: #{smpl_mixik_forward.1} parent=19 // pred_region
          %s423 = sand.u32 %s26, 1
          %s424 = scalar_lea.sflag [#allocation11], %s423
          %s425 = sand.u32 %s230, 1
          %s426 = smul.addr %s425, 14
          %s427 = scalar_lea.vmem [#allocation12], %s426
          %s429 = ssub.s32 224, 224
          %430 = vsyncadd %s424, %s429
          %s431 = smul.addr %s33, 14
          %s432 = smul.addr %s431, 16
          %s433 = scalar_lea.hbm %s7, %s432
          %s434 = sshll.u32 %s427, 4
          %s435 = int_to_ptr.vmem [resolvable:$true] %s434
          %440 = dma.hbm_to_vmem [thread:$0]  %s433, 224, %s435, %s424, 32, 32, 2
        $region48: #{smpl_mixik_forward.1} parent=19 // pred_fallthru
          _
      $region20: #{smpl_mixik_forward.1} parent=5 // pred_fallthru
        _
      %p441 = scmp.le.s32.totalorder 1, %s26
      %p442 = scmp.lt.s32.totalorder %s26, 4
      %p443 = pnand %p441, %p442
      %p444 = pneg %p443
      // Predicated region
      $region49: #{smpl_mixik_forward.1} parent=5 // pred_check
        _
      $region50: #{smpl_mixik_forward.1} parent=5 // pred_check_branch
        %446 = sbr.rel (%p443) target = $region52
      $region51: #{smpl_mixik_forward.1} parent=5 // pred_region
        %s447 = ssub.s32 %s26, 1
        %s448 = sand.u32 %s77, 1
        %s449 = scalar_lea.sflag [#allocation3], %s448
        %s450 = sand.u32 %s77, 1
        %s451 = smul.addr %s450, 128
        %s452 = scalar_lea.vmem [#allocation2], %s451
        // Predicated region
        $region53: #{smpl_mixik_forward.1} parent=51 // pred_check
          %p453 = pneg %p90
        $region54: #{smpl_mixik_forward.1} parent=51 // pred_check_branch
          %455 = sbr.rel (%p453) target = $region56
        $region55: #{smpl_mixik_forward.1} parent=51 // pred_region
          %456 = dma.done %s449, 2048
        $region56: #{smpl_mixik_forward.1} parent=51 // pred_fallthru
          _
        %s457 = sand.u32 %s31, 1
        %s458 = scalar_lea.sflag [#allocation5], %s457
        %s459 = sand.u32 %s103, 1
        %s460 = smul.addr %s459, 2
        %s461 = scalar_lea.vmem [#allocation4], %s460
        // Predicated region
        $region57: #{smpl_mixik_forward.1} parent=51 // pred_check
          %p462 = pneg %p116
        $region58: #{smpl_mixik_forward.1} parent=51 // pred_check_branch
          %464 = sbr.rel (%p462) target = $region60
        $region59: #{smpl_mixik_forward.1} parent=51 // pred_region
          %465 = dma.done %s458, 32
        $region60: #{smpl_mixik_forward.1} parent=51 // pred_fallthru
          _
        %s466 = sand.u32 %s31, 1
        %s467 = scalar_lea.sflag [#allocation5], %s466
        %s468 = sand.u32 %s129, 1
        %s469 = smul.addr %s468, 1536
        %s470 = scalar_lea.vmem [#allocation6], %s469
        // Predicated region
        $region61: #{smpl_mixik_forward.1} parent=51 // pred_check
          %p471 = pneg %p142
        $region62: #{smpl_mixik_forward.1} parent=51 // pred_check_branch
          %473 = sbr.rel (%p471) target = $region64
        $region63: #{smpl_mixik_forward.1} parent=51 // pred_region
          %474 = dma.done %s467, 24576
        $region64: #{smpl_mixik_forward.1} parent=51 // pred_fallthru
          _
        %s475 = sand.u32 %s31, 1
        %s476 = scalar_lea.sflag [#allocation8], %s475
        %s477 = sand.u32 %s155, 1
        %s478 = smul.addr %s477, 12
        %s479 = scalar_lea.vmem [#allocation7], %s478
        // Predicated region
        $region65: #{smpl_mixik_forward.1} parent=51 // pred_check
          %p480 = pneg %p168
        $region66: #{smpl_mixik_forward.1} parent=51 // pred_check_branch
          %482 = sbr.rel (%p480) target = $region68
        $region67: #{smpl_mixik_forward.1} parent=51 // pred_region
          %483 = dma.done %s476, 192
        $region68: #{smpl_mixik_forward.1} parent=51 // pred_fallthru
          _
        %s484 = sand.u32 %s31, 1
        %s485 = scalar_lea.sflag [#allocation8], %s484
        %s486 = sand.u32 %s181, 1
        %s487 = smul.addr %s486, 128
        %s488 = scalar_lea.vmem [#allocation9], %s487
        // Predicated region
        $region69: #{smpl_mixik_forward.1} parent=51 // pred_check
          %p489 = pneg %p194
        $region70: #{smpl_mixik_forward.1} parent=51 // pred_check_branch
          %491 = sbr.rel (%p489) target = $region72
        $region71: #{smpl_mixik_forward.1} parent=51 // pred_region
          %492 = dma.done %s485, 2048
        $region72: #{smpl_mixik_forward.1} parent=51 // pred_fallthru
          _
        %s493 = sand.u32 %s31, 1
        %s494 = scalar_lea.sflag [#allocation11], %s493
        %s495 = sand.u32 %s207, 1
        %s496 = scalar_lea.vmem [#allocation10], %s495
        // Predicated region
        $region73: #{smpl_mixik_forward.1} parent=51 // pred_check
          %p497 = pneg %p220
        $region74: #{smpl_mixik_forward.1} parent=51 // pred_check_branch
          %499 = sbr.rel (%p497) target = $region76
        $region75: #{smpl_mixik_forward.1} parent=51 // pred_region
          %500 = dma.done %s494, 16
        $region76: #{smpl_mixik_forward.1} parent=51 // pred_fallthru
          _
        %s501 = sand.u32 %s31, 1
        %s502 = scalar_lea.sflag [#allocation11], %s501
        %s503 = sand.u32 %s233, 1
        %s504 = smul.addr %s503, 14
        %s505 = scalar_lea.vmem [#allocation12], %s504
        // Predicated region
        $region77: #{smpl_mixik_forward.1} parent=51 // pred_check
          %p506 = pneg %p246
        $region78: #{smpl_mixik_forward.1} parent=51 // pred_check_branch
          %508 = sbr.rel (%p506) target = $region80
        $region79: #{smpl_mixik_forward.1} parent=51 // pred_region
          %509 = dma.done %s502, 224
        $region80: #{smpl_mixik_forward.1} parent=51 // pred_fallthru
          _
        %p510 = scmp.lt.s32.totalorder %s36, 0
        %s511 = scalar_select %p510, %s36, 0
        %s512 = smul.addr %s511, 8
        %s513 = scalar_lea.vmem %s0, %s512
        %p514 = pneg %p64
        %p515 = pneg %p61
        %s516 = sand.u32 %s77, 1
        %s517 = scalar_lea.sflag [#allocation3], %s516
        %s518 = sand.u32 %s77, 1
        %s519 = smul.addr %s518, 128
        %s520 = scalar_lea.vmem [#allocation2], %s519
        %p521 = pneg %p90
        %p522 = pneg %p87
        %s523 = sand.u32 %s31, 1
        %s524 = scalar_lea.sflag [#allocation5], %s523
        %s525 = sand.u32 %s103, 1
        %s526 = smul.addr %s525, 2
        %s527 = scalar_lea.vmem [#allocation4], %s526
        %p528 = pneg %p116
        %p529 = pneg %p113
        %s530 = sand.u32 %s31, 1
        %s531 = scalar_lea.sflag [#allocation5], %s530
        %s532 = sand.u32 %s129, 1
        %s533 = smul.addr %s532, 1536
        %s534 = scalar_lea.vmem [#allocation6], %s533
        %p535 = pneg %p142
        %p536 = pneg %p139
        %s537 = sand.u32 %s31, 1
        %s538 = scalar_lea.sflag [#allocation8], %s537
        %s539 = sand.u32 %s155, 1
        %s540 = smul.addr %s539, 12
        %s541 = scalar_lea.vmem [#allocation7], %s540
        %p542 = pneg %p168
        %p543 = pneg %p165
        %s544 = sand.u32 %s31, 1
        %s545 = scalar_lea.sflag [#allocation8], %s544
        %s546 = sand.u32 %s181, 1
        %s547 = smul.addr %s546, 128
        %s548 = scalar_lea.vmem [#allocation9], %s547
        %p549 = pneg %p194
        %p550 = pneg %p191
        %s551 = sand.u32 %s31, 1
        %s552 = scalar_lea.sflag [#allocation11], %s551
        %s553 = sand.u32 %s207, 1
        %s554 = scalar_lea.vmem [#allocation10], %s553
        %p555 = pneg %p220
        %p556 = pneg %p217
        %s557 = sand.u32 %s31, 1
        %s558 = scalar_lea.sflag [#allocation11], %s557
        %s559 = sand.u32 %s233, 1
        %s560 = smul.addr %s559, 14
        %s561 = scalar_lea.vmem [#allocation12], %s560
        %p562 = pneg %p246
        %p563 = pneg %p243
        %p564 = pneg %p274
        %p565 = pneg %p271
        %p566 = scmp.lt.s32.totalorder %s35, 2
        %s567 = scalar_select %p566, %s35, 2
        %p568 = scmp.lt.s32.totalorder %s36, 0
        %s569 = scalar_select %p568, %s36, 0
        %s570 = sadd.s32 %s569, %s567
        %s571 = smul.addr %s570, 8
        %s572 = scalar_lea.vmem %s8, %s571
        %p573 = scmp.lt.s32.totalorder %s36, 0
        %s574 = scalar_select %p573, %s36, 0
        %s575 = smul.addr %s574, 8
        %s576 = scalar_lea.vmem %s0, %s575
        %p577 = scmp.lt.s32.totalorder %s35, 2
        %s578 = scalar_select %p577, %s35, 2
        %p579 = scmp.lt.s32.totalorder %s36, 0
        %s580 = scalar_select %p579, %s36, 0
        %s581 = sadd.s32 %s580, %s578
        %s582 = smul.addr %s581, 8
        %s583 = scalar_lea.vmem %s8, %s582
        %v585 = vld [vmem:[%s576] sm:$0xff]
        %v586 = vpack.c.bf16 %v585, %v585
        %v587 = vld [vmem:[%s452] sm:$0xff]
        %v588 = vld [vmem:[%s452 + $0x8] sm:$0xff]
        %v589 = vld [vmem:[%s452 + $0x10] sm:$0xff]
        %v590 = vld [vmem:[%s452 + $0x18] sm:$0xff]
        %v591 = vld [vmem:[%s452 + $0x20] sm:$0xff]
        %v592 = vld [vmem:[%s452 + $0x28] sm:$0xff]
        %v593 = vld [vmem:[%s452 + $0x30] sm:$0xff]
        %v594 = vld [vmem:[%s452 + $0x38] sm:$0xff]
        %v595 = vld [vmem:[%s452 + $0x40] sm:$0xff]
        %v596 = vld [vmem:[%s452 + $0x48] sm:$0xff]
        %v597 = vld [vmem:[%s452 + $0x50] sm:$0xff]
        %v598 = vld [vmem:[%s452 + $0x58] sm:$0xff]
        %v599 = vld [vmem:[%s452 + $0x60] sm:$0xff]
        %v600 = vld [vmem:[%s452 + $0x68] sm:$0xff]
        %v601 = vld [vmem:[%s452 + $0x70] sm:$0xff]
        %v602 = vld [vmem:[%s452 + $0x78] sm:$0xff]
        %v603 = vld [vmem:[%s461] sm:$0x3]
        %v604 = vld [vmem:[%s505] sm:$0x3]
        %v621 = vunpack.c.l.b16 %v587
        %v622 = vunpack.c.h.b16 %v587
        %v623 = vunpack.c.l.b16 %v588
        %v624 = vunpack.c.h.b16 %v588
        %v625 = vunpack.c.l.b16 %v589
        %v626 = vunpack.c.h.b16 %v589
        %v627 = vunpack.c.l.b16 %v590
        %v628 = vunpack.c.h.b16 %v590
        %v629 = vunpack.c.l.b16 %v591
        %v630 = vunpack.c.h.b16 %v591
        %v631 = vunpack.c.l.b16 %v592
        %v632 = vunpack.c.h.b16 %v592
        %v633 = vunpack.c.l.b16 %v593
        %v634 = vunpack.c.h.b16 %v593
        %v635 = vunpack.c.l.b16 %v594
        %v636 = vunpack.c.h.b16 %v594
        %v637 = vunpack.c.l.b16 %v595
        %v638 = vunpack.c.h.b16 %v595
        %v639 = vunpack.c.l.b16 %v596
        %v640 = vunpack.c.h.b16 %v596
        %v641 = vunpack.c.l.b16 %v597
        %v642 = vunpack.c.h.b16 %v597
        %v643 = vunpack.c.l.b16 %v598
        %v644 = vunpack.c.h.b16 %v598
        %v645 = vunpack.c.l.b16 %v599
        %v646 = vunpack.c.h.b16 %v599
        %v647 = vunpack.c.l.b16 %v600
        %v648 = vunpack.c.h.b16 %v600
        %v649 = vunpack.c.l.b16 %v601
        %v650 = vunpack.c.h.b16 %v601
        %v651 = vunpack.c.l.b16 %v602
        %v652 = vunpack.c.h.b16 %v602
        %v653 = vpack.c.b16 %v623, %v621
        %v654 = vpack.c.b16 %v624, %v622
        %v655 = vpack.c.b16 %v627, %v625
        %v656 = vpack.c.b16 %v628, %v626
        %v657 = vpack.c.b16 %v631, %v629
        %v658 = vpack.c.b16 %v632, %v630
        %v659 = vpack.c.b16 %v635, %v633
        %v660 = vpack.c.b16 %v636, %v634
        %v661 = vpack.c.b16 %v639, %v637
        %v662 = vpack.c.b16 %v640, %v638
        %v663 = vpack.c.b16 %v643, %v641
        %v664 = vpack.c.b16 %v644, %v642
        %v665 = vpack.c.b16 %v647, %v645
        %v666 = vpack.c.b16 %v648, %v646
        %v667 = vpack.c.b16 %v651, %v649
        %v668 = vpack.c.b16 %v652, %v650
        %685 = vmatprep.subr.bf16.mxu0 %v654
        %686 = vmatpush1.bf16.msra.mxu0 %v653
        %687 = vmatprep.subr.bf16.mxu0 %v656
        %688 = vmatpush1.bf16.msra.mxu0 %v655
        %689 = vmatprep.subr.bf16.mxu0 %v658
        %690 = vmatpush1.bf16.msra.mxu0 %v657
        %691 = vmatprep.subr.bf16.mxu0 %v660
        %692 = vmatpush1.bf16.msra.mxu0 %v659
        %693 = vmatprep.subr.bf16.mxu0 %v662
        %694 = vmatpush1.bf16.msra.mxu0 %v661
        %695 = vmatprep.subr.bf16.mxu0 %v664
        %696 = vmatpush1.bf16.msra.mxu0 %v663
        %697 = vmatprep.subr.bf16.mxu0 %v666
        %698 = vmatpush1.bf16.msra.mxu0 %v665
        %699 = vmatprep.subr.bf16.mxu0 %v668
        %700 = vmatpush1.bf16.msra.mxu0 %v667
        %701 = vmatprep.subr.bf16.mxu0 0
        %702 = vmatpush1.bf16.msra.mxu0 0
        %703 = vmatprep.subr.bf16.mxu0 0
        %704 = vmatpush1.bf16.msra.mxu0 0
        %705 = vmatprep.subr.bf16.mxu0 0
        %706 = vmatpush1.bf16.msra.mxu0 0
        %707 = vmatprep.subr.bf16.mxu0 0
        %708 = vmatpush1.bf16.msra.mxu0 0
        %709 = vmatprep.subr.bf16.mxu0 0
        %710 = vmatpush1.bf16.msra.mxu0 0
        %711 = vmatprep.subr.bf16.mxu0 0
        %712 = vmatpush1.bf16.msra.mxu0 0
        %713 = vmatprep.subr.bf16.mxu0 0
        %714 = vmatpush1.bf16.msra.mxu0 0
        %715 = vmatprep.subr.bf16.mxu0 0
        %716 = vmatpush1.bf16.msra.mxu0 0
        %717 = vmatprep.mubr.bf16.mxu0 0
        %718 = vmatmul.mubr.bf16.gmra.mrb[0].mxu0 %v586
        %v719 = vpop.f32.mrb[0].mxu0
        %v720 = vadd.f32 0.0, %v719
        %v721 = vpop.f32.mrb[0].mxu0
        %v722 = vadd.f32 0.0, %v721
        %v723 = vpop.f32.mrb[0].mxu0
        %v724 = vpop.f32.mrb[0].mxu0
        %725 = vdwg.mxu0
        %v726 = vpack.c.bf16 %v720, %v720
        %v727 = vpack.c.bf16 %v722, %v722
        %v729 = vlaneseq
        %v730 = vshrl.u32 %v729, 7
        %v731 = vsub.s32 0, %v730
        %v732 = vrot.slane %v603, %v731
        %v733 = vlaneseq
        %v734 = vshrl.u32 %v733, 7
        %v735 = vsub.s32 1, %v734
        %v736 = vrot.slane %v603, %v735
        %v739 = vpack.c.bf16 %v732, %v732
        %v740 = vpack.c.bf16 %v736, %v736
        %v742 = vpack.i.b16 %v739, %v739
        %v744 = vlaneseq
        %v745 = vshrl.u32 %v744, 7
        %v746 = vsub.s32 0, %v745
        %v747 = vrot.slane %v742, %v746
        %v749 = vpack.i.b16 %v740, %v740
        %v751 = vlaneseq
        %v752 = vshrl.u32 %v751, 7
        %v753 = vsub.s32 0, %v752
        %v754 = vrot.slane %v749, %v753
        %v755 = vadd.bf16 %v726, %v747
        %v756 = vadd.bf16 %v727, %v754
        %vm757 = vcmp.gt.bf16.partialorder %v755, 0
        %vm758 = vcmp.gt.bf16.partialorder %v756, 0
        %v760 = vlaneseq
        %v761 = vshrl.u32 %v760, 7
        %v762 = vsub.s32 0, %v761
        %v763 = vrot.slane %v604, %v762
        %v764 = vlaneseq
        %v765 = vshrl.u32 %v764, 7
        %v766 = vsub.s32 1, %v765
        %v767 = vrot.slane %v604, %v766
        %v770 = vpack.c.bf16 %v763, %v763
        %v771 = vpack.c.bf16 %v767, %v767
        %v773 = vpack.i.b16 %v770, %v770
        %v775 = vlaneseq
        %v776 = vshrl.u32 %v775, 7
        %v777 = vsub.s32 0, %v776
        %v778 = vrot.slane %v773, %v777
        %v780 = vpack.i.b16 %v771, %v771
        %v782 = vlaneseq
        %v783 = vshrl.u32 %v782, 7
        %v784 = vsub.s32 0, %v783
        %v785 = vrot.slane %v780, %v784
        %v786 = vmul.bf16 %v778, %v755
        %v787 = vmul.bf16 %v785, %v756
        %v788 = vsel %vm757, %v755, %v786
        %v789 = vsel %vm758, %v756, %v787
        %v790 = vld [vmem:[%s470] sm:$0xff]
        %v791 = vld [vmem:[%s470 + $0x8] sm:$0xff]
        %v792 = vld [vmem:[%s470 + $0x10] sm:$0xff]
        %v793 = vld [vmem:[%s470 + $0x18] sm:$0xff]
        %v794 = vld [vmem:[%s470 + $0x20] sm:$0xff]
        %v795 = vld [vmem:[%s470 + $0x28] sm:$0xff]
        %v796 = vld [vmem:[%s470 + $0x30] sm:$0xff]
        %v797 = vld [vmem:[%s470 + $0x38] sm:$0xff]
        %v798 = vld [vmem:[%s470 + $0x40] sm:$0xff]
        %v799 = vld [vmem:[%s470 + $0x48] sm:$0xff]
        %v800 = vld [vmem:[%s470 + $0x50] sm:$0xff]
        %v801 = vld [vmem:[%s470 + $0x58] sm:$0xff]
        %v802 = vld [vmem:[%s470 + $0x60] sm:$0xff]
        %v803 = vld [vmem:[%s470 + $0x68] sm:$0xff]
        %v804 = vld [vmem:[%s470 + $0x70] sm:$0xff]
        %v805 = vld [vmem:[%s470 + $0x78] sm:$0xff]
        %v806 = vld [vmem:[%s470 + $0x80] sm:$0xff]
        %v807 = vld [vmem:[%s470 + $0x88] sm:$0xff]
        %v808 = vld [vmem:[%s470 + $0x90] sm:$0xff]
        %v809 = vld [vmem:[%s470 + $0x98] sm:$0xff]
        %v810 = vld [vmem:[%s470 + $0xa0] sm:$0xff]
        %v811 = vld [vmem:[%s470 + $0xa8] sm:$0xff]
        %v812 = vld [vmem:[%s470 + $0xb0] sm:$0xff]
        %v813 = vld [vmem:[%s470 + $0xb8] sm:$0xff]
        %v814 = vld [vmem:[%s470 + $0xc0] sm:$0xff]
        %v815 = vld [vmem:[%s470 + $0xc8] sm:$0xff]
        %v816 = vld [vmem:[%s470 + $0xd0] sm:$0xff]
        %v817 = vld [vmem:[%s470 + $0xd8] sm:$0xff]
        %v818 = vld [vmem:[%s470 + $0xe0] sm:$0xff]
        %v819 = vld [vmem:[%s470 + $0xe8] sm:$0xff]
        %v820 = vld [vmem:[%s470 + $0xf0] sm:$0xff]
        %v821 = vld [vmem:[%s470 + $0xf8] sm:$0xff]
        %v822 = vld [vmem:[%s479] sm:$0x3]
        %s823 = scalar_lea.vmem %s505, 2 [#allocation12]
        %v824 = vld [vmem:[%s823] sm:$0x3]
        %v857 = vunpack.c.l.b16 %v790
        %v858 = vunpack.c.h.b16 %v790
        %v859 = vunpack.c.l.b16 %v791
        %v860 = vunpack.c.h.b16 %v791
        %v861 = vunpack.c.l.b16 %v792
        %v862 = vunpack.c.h.b16 %v792
        %v863 = vunpack.c.l.b16 %v793
        %v864 = vunpack.c.h.b16 %v793
        %v865 = vunpack.c.l.b16 %v794
        %v866 = vunpack.c.h.b16 %v794
        %v867 = vunpack.c.l.b16 %v795
        %v868 = vunpack.c.h.b16 %v795
        %v869 = vunpack.c.l.b16 %v796
        %v870 = vunpack.c.h.b16 %v796
        %v871 = vunpack.c.l.b16 %v797
        %v872 = vunpack.c.h.b16 %v797
        %v873 = vunpack.c.l.b16 %v798
        %v874 = vunpack.c.h.b16 %v798
        %v875 = vunpack.c.l.b16 %v799
        %v876 = vunpack.c.h.b16 %v799
        %v877 = vunpack.c.l.b16 %v800
        %v878 = vunpack.c.h.b16 %v800
        %v879 = vunpack.c.l.b16 %v801
        %v880 = vunpack.c.h.b16 %v801
        %v881 = vunpack.c.l.b16 %v802
        %v882 = vunpack.c.h.b16 %v802
        %v883 = vunpack.c.l.b16 %v803
        %v884 = vunpack.c.h.b16 %v803
        %v885 = vunpack.c.l.b16 %v804
        %v886 = vunpack.c.h.b16 %v804
        %v887 = vunpack.c.l.b16 %v805
        %v888 = vunpack.c.h.b16 %v805
        %v889 = vunpack.c.l.b16 %v806
        %v890 = vunpack.c.h.b16 %v806
        %v891 = vunpack.c.l.b16 %v807
        %v892 = vunpack.c.h.b16 %v807
        %v893 = vunpack.c.l.b16 %v808
        %v894 = vunpack.c.h.b16 %v808
        %v895 = vunpack.c.l.b16 %v809
        %v896 = vunpack.c.h.b16 %v809
        %v897 = vunpack.c.l.b16 %v810
        %v898 = vunpack.c.h.b16 %v810
        %v899 = vunpack.c.l.b16 %v811
        %v900 = vunpack.c.h.b16 %v811
        %v901 = vunpack.c.l.b16 %v812
        %v902 = vunpack.c.h.b16 %v812
        %v903 = vunpack.c.l.b16 %v813
        %v904 = vunpack.c.h.b16 %v813
        %v905 = vunpack.c.l.b16 %v814
        %v906 = vunpack.c.h.b16 %v814
        %v907 = vunpack.c.l.b16 %v815
        %v908 = vunpack.c.h.b16 %v815
        %v909 = vunpack.c.l.b16 %v816
        %v910 = vunpack.c.h.b16 %v816
        %v911 = vunpack.c.l.b16 %v817
        %v912 = vunpack.c.h.b16 %v817
        %v913 = vunpack.c.l.b16 %v818
        %v914 = vunpack.c.h.b16 %v818
        %v915 = vunpack.c.l.b16 %v819
        %v916 = vunpack.c.h.b16 %v819
        %v917 = vunpack.c.l.b16 %v820
        %v918 = vunpack.c.h.b16 %v820
        %v919 = vunpack.c.l.b16 %v821
        %v920 = vunpack.c.h.b16 %v821
        %v921 = vpack.c.b16 %v859, %v857
        %v922 = vpack.c.b16 %v860, %v858
        %v923 = vpack.c.b16 %v863, %v861
        %v924 = vpack.c.b16 %v864, %v862
        %v925 = vpack.c.b16 %v867, %v865
        %v926 = vpack.c.b16 %v868, %v866
        %v927 = vpack.c.b16 %v871, %v869
        %v928 = vpack.c.b16 %v872, %v870
        %v929 = vpack.c.b16 %v875, %v873
        %v930 = vpack.c.b16 %v876, %v874
        %v931 = vpack.c.b16 %v879, %v877
        %v932 = vpack.c.b16 %v880, %v878
        %v933 = vpack.c.b16 %v883, %v881
        %v934 = vpack.c.b16 %v884, %v882
        %v935 = vpack.c.b16 %v887, %v885
        %v936 = vpack.c.b16 %v888, %v886
        %v937 = vpack.c.b16 %v891, %v889
        %v938 = vpack.c.b16 %v892, %v890
        %v939 = vpack.c.b16 %v895, %v893
        %v940 = vpack.c.b16 %v896, %v894
        %v941 = vpack.c.b16 %v899, %v897
        %v942 = vpack.c.b16 %v900, %v898
        %v943 = vpack.c.b16 %v903, %v901
        %v944 = vpack.c.b16 %v904, %v902
        %v945 = vpack.c.b16 %v907, %v905
        %v946 = vpack.c.b16 %v908, %v906
        %v947 = vpack.c.b16 %v911, %v909
        %v948 = vpack.c.b16 %v912, %v910
        %v949 = vpack.c.b16 %v915, %v913
        %v950 = vpack.c.b16 %v916, %v914
        %v951 = vpack.c.b16 %v919, %v917
        %v952 = vpack.c.b16 %v920, %v918
        %985 = vmatprep.subr.bf16.mxu0 %v922
        %986 = vmatpush1.bf16.msra.mxu0 %v921
        %987 = vmatprep.subr.bf16.mxu0 %v924
        %988 = vmatpush1.bf16.msra.mxu0 %v923
        %989 = vmatprep.subr.bf16.mxu0 %v926
        %990 = vmatpush1.bf16.msra.mxu0 %v925
        %991 = vmatprep.subr.bf16.mxu0 %v928
        %992 = vmatpush1.bf16.msra.mxu0 %v927
        %993 = vmatprep.subr.bf16.mxu0 %v930
        %994 = vmatpush1.bf16.msra.mxu0 %v929
        %995 = vmatprep.subr.bf16.mxu0 %v932
        %996 = vmatpush1.bf16.msra.mxu0 %v931
        %997 = vmatprep.subr.bf16.mxu0 %v934
        %998 = vmatpush1.bf16.msra.mxu0 %v933
        %999 = vmatprep.subr.bf16.mxu0 %v936
        %1000 = vmatpush1.bf16.msra.mxu0 %v935
        %1001 = vmatprep.subr.bf16.mxu0 %v938
        %1002 = vmatpush1.bf16.msra.mxu0 %v937
        %1003 = vmatprep.subr.bf16.mxu0 %v940
        %1004 = vmatpush1.bf16.msra.mxu0 %v939
        %1005 = vmatprep.subr.bf16.mxu0 %v942
        %1006 = vmatpush1.bf16.msra.mxu0 %v941
        %1007 = vmatprep.subr.bf16.mxu0 %v944
        %1008 = vmatpush1.bf16.msra.mxu0 %v943
        %1009 = vmatprep.subr.bf16.mxu0 %v946
        %1010 = vmatpush1.bf16.msra.mxu0 %v945
        %1011 = vmatprep.subr.bf16.mxu0 %v948
        %1012 = vmatpush1.bf16.msra.mxu0 %v947
        %1013 = vmatprep.subr.bf16.mxu0 %v950
        %1014 = vmatpush1.bf16.msra.mxu0 %v949
        %1015 = vmatprep.subr.bf16.mxu0 %v952
        %1016 = vmatpush1.bf16.msra.mxu0 %v951
        %1017 = vmatprep.mubr.bf16.mxu0 %v789
        %1018 = vmatmul.mubr.bf16.gmra.mrb[0].mxu0 %v788
        %v1019 = vpop.f32.mrb[0].mxu0
        %v1020 = vadd.f32 0.0, %v1019
        %v1021 = vpop.f32.mrb[0].mxu0
        %v1022 = vadd.f32 0.0, %v1021
        %v1023 = vpop.f32.mrb[0].mxu0
        %v1024 = vpop.f32.mrb[0].mxu0
        %1025 = vdwg.mxu0
        %v1026 = vpack.c.bf16 %v1020, %v1020
        %v1027 = vpack.c.bf16 %v1022, %v1022
        %v1029 = vlaneseq
        %v1030 = vshrl.u32 %v1029, 7
        %v1031 = vsub.s32 0, %v1030
        %v1032 = vrot.slane %v822, %v1031
        %v1033 = vlaneseq
        %v1034 = vshrl.u32 %v1033, 7
        %v1035 = vsub.s32 1, %v1034
        %v1036 = vrot.slane %v822, %v1035
        %v1039 = vpack.c.bf16 %v1032, %v1032
        %v1040 = vpack.c.bf16 %v1036, %v1036
        %v1042 = vpack.i.b16 %v1039, %v1039
        %v1044 = vlaneseq
        %v1045 = vshrl.u32 %v1044, 7
        %v1046 = vsub.s32 0, %v1045
        %v1047 = vrot.slane %v1042, %v1046
        %v1049 = vpack.i.b16 %v1040, %v1040
        %v1051 = vlaneseq
        %v1052 = vshrl.u32 %v1051, 7
        %v1053 = vsub.s32 0, %v1052
        %v1054 = vrot.slane %v1049, %v1053
        %v1055 = vadd.bf16 %v1026, %v1047
        %v1056 = vadd.bf16 %v1027, %v1054
        %vm1057 = vcmp.gt.bf16.partialorder %v1055, 0
        %vm1058 = vcmp.gt.bf16.partialorder %v1056, 0
        %v1060 = vlaneseq
        %v1061 = vshrl.u32 %v1060, 7
        %v1062 = vsub.s32 0, %v1061
        %v1063 = vrot.slane %v824, %v1062
        %v1064 = vlaneseq
        %v1065 = vshrl.u32 %v1064, 7
        %v1066 = vsub.s32 1, %v1065
        %v1067 = vrot.slane %v824, %v1066
        %v1070 = vpack.c.bf16 %v1063, %v1063
        %v1071 = vpack.c.bf16 %v1067, %v1067
        %v1073 = vpack.i.b16 %v1070, %v1070
        %v1075 = vlaneseq
        %v1076 = vshrl.u32 %v1075, 7
        %v1077 = vsub.s32 0, %v1076
        %v1078 = vrot.slane %v1073, %v1077
        %v1080 = vpack.i.b16 %v1071, %v1071
        %v1082 = vlaneseq
        %v1083 = vshrl.u32 %v1082, 7
        %v1084 = vsub.s32 0, %v1083
        %v1085 = vrot.slane %v1080, %v1084
        %v1086 = vmul.bf16 %v1078, %v1055
        %v1087 = vmul.bf16 %v1085, %v1056
        %v1088 = vsel %vm1057, %v1055, %v1086
        %v1089 = vsel %vm1058, %v1056, %v1087
        %s1090 = scalar_lea.vmem %s470, 256 [#allocation6]
        %v1091 = vld [vmem:[%s1090] sm:$0xff]
        %v1092 = vld [vmem:[%s1090 + $0x8] sm:$0xff]
        %v1093 = vld [vmem:[%s1090 + $0x10] sm:$0xff]
        %v1094 = vld [vmem:[%s1090 + $0x18] sm:$0xff]
        %v1095 = vld [vmem:[%s1090 + $0x20] sm:$0xff]
        %v1096 = vld [vmem:[%s1090 + $0x28] sm:$0xff]
        %v1097 = vld [vmem:[%s1090 + $0x30] sm:$0xff]
        %v1098 = vld [vmem:[%s1090 + $0x38] sm:$0xff]
        %v1099 = vld [vmem:[%s1090 + $0x40] sm:$0xff]
        %v1100 = vld [vmem:[%s1090 + $0x48] sm:$0xff]
        %v1101 = vld [vmem:[%s1090 + $0x50] sm:$0xff]
        %v1102 = vld [vmem:[%s1090 + $0x58] sm:$0xff]
        %v1103 = vld [vmem:[%s1090 + $0x60] sm:$0xff]
        %v1104 = vld [vmem:[%s1090 + $0x68] sm:$0xff]
        %v1105 = vld [vmem:[%s1090 + $0x70] sm:$0xff]
        %v1106 = vld [vmem:[%s1090 + $0x78] sm:$0xff]
        %v1107 = vld [vmem:[%s1090 + $0x80] sm:$0xff]
        %v1108 = vld [vmem:[%s1090 + $0x88] sm:$0xff]
        %v1109 = vld [vmem:[%s1090 + $0x90] sm:$0xff]
        %v1110 = vld [vmem:[%s1090 + $0x98] sm:$0xff]
        %v1111 = vld [vmem:[%s1090 + $0xa0] sm:$0xff]
        %v1112 = vld [vmem:[%s1090 + $0xa8] sm:$0xff]
        %v1113 = vld [vmem:[%s1090 + $0xb0] sm:$0xff]
        %v1114 = vld [vmem:[%s1090 + $0xb8] sm:$0xff]
        %v1115 = vld [vmem:[%s1090 + $0xc0] sm:$0xff]
        %v1116 = vld [vmem:[%s1090 + $0xc8] sm:$0xff]
        %v1117 = vld [vmem:[%s1090 + $0xd0] sm:$0xff]
        %v1118 = vld [vmem:[%s1090 + $0xd8] sm:$0xff]
        %v1119 = vld [vmem:[%s1090 + $0xe0] sm:$0xff]
        %v1120 = vld [vmem:[%s1090 + $0xe8] sm:$0xff]
        %v1121 = vld [vmem:[%s1090 + $0xf0] sm:$0xff]
        %v1122 = vld [vmem:[%s1090 + $0xf8] sm:$0xff]
        %s1123 = scalar_lea.vmem %s479, 2 [#allocation7]
        %v1124 = vld [vmem:[%s1123] sm:$0x3]
        %s1125 = scalar_lea.vmem %s505, 4 [#allocation12]
        %v1126 = vld [vmem:[%s1125] sm:$0x3]
        %v1159 = vunpack.c.l.b16 %v1091
        %v1160 = vunpack.c.h.b16 %v1091
        %v1161 = vunpack.c.l.b16 %v1092
        %v1162 = vunpack.c.h.b16 %v1092
        %v1163 = vunpack.c.l.b16 %v1093
        %v1164 = vunpack.c.h.b16 %v1093
        %v1165 = vunpack.c.l.b16 %v1094
        %v1166 = vunpack.c.h.b16 %v1094
        %v1167 = vunpack.c.l.b16 %v1095
        %v1168 = vunpack.c.h.b16 %v1095
        %v1169 = vunpack.c.l.b16 %v1096
        %v1170 = vunpack.c.h.b16 %v1096
        %v1171 = vunpack.c.l.b16 %v1097
        %v1172 = vunpack.c.h.b16 %v1097
        %v1173 = vunpack.c.l.b16 %v1098
        %v1174 = vunpack.c.h.b16 %v1098
        %v1175 = vunpack.c.l.b16 %v1099
        %v1176 = vunpack.c.h.b16 %v1099
        %v1177 = vunpack.c.l.b16 %v1100
        %v1178 = vunpack.c.h.b16 %v1100
        %v1179 = vunpack.c.l.b16 %v1101
        %v1180 = vunpack.c.h.b16 %v1101
        %v1181 = vunpack.c.l.b16 %v1102
        %v1182 = vunpack.c.h.b16 %v1102
        %v1183 = vunpack.c.l.b16 %v1103
        %v1184 = vunpack.c.h.b16 %v1103
        %v1185 = vunpack.c.l.b16 %v1104
        %v1186 = vunpack.c.h.b16 %v1104
        %v1187 = vunpack.c.l.b16 %v1105
        %v1188 = vunpack.c.h.b16 %v1105
        %v1189 = vunpack.c.l.b16 %v1106
        %v1190 = vunpack.c.h.b16 %v1106
        %v1191 = vunpack.c.l.b16 %v1107
        %v1192 = vunpack.c.h.b16 %v1107
        %v1193 = vunpack.c.l.b16 %v1108
        %v1194 = vunpack.c.h.b16 %v1108
        %v1195 = vunpack.c.l.b16 %v1109
        %v1196 = vunpack.c.h.b16 %v1109
        %v1197 = vunpack.c.l.b16 %v1110
        %v1198 = vunpack.c.h.b16 %v1110
        %v1199 = vunpack.c.l.b16 %v1111
        %v1200 = vunpack.c.h.b16 %v1111
        %v1201 = vunpack.c.l.b16 %v1112
        %v1202 = vunpack.c.h.b16 %v1112
        %v1203 = vunpack.c.l.b16 %v1113
        %v1204 = vunpack.c.h.b16 %v1113
        %v1205 = vunpack.c.l.b16 %v1114
        %v1206 = vunpack.c.h.b16 %v1114
        %v1207 = vunpack.c.l.b16 %v1115
        %v1208 = vunpack.c.h.b16 %v1115
        %v1209 = vunpack.c.l.b16 %v1116
        %v1210 = vunpack.c.h.b16 %v1116
        %v1211 = vunpack.c.l.b16 %v1117
        %v1212 = vunpack.c.h.b16 %v1117
        %v1213 = vunpack.c.l.b16 %v1118
        %v1214 = vunpack.c.h.b16 %v1118
        %v1215 = vunpack.c.l.b16 %v1119
        %v1216 = vunpack.c.h.b16 %v1119
        %v1217 = vunpack.c.l.b16 %v1120
        %v1218 = vunpack.c.h.b16 %v1120
        %v1219 = vunpack.c.l.b16 %v1121
        %v1220 = vunpack.c.h.b16 %v1121
        %v1221 = vunpack.c.l.b16 %v1122
        %v1222 = vunpack.c.h.b16 %v1122
        %v1223 = vpack.c.b16 %v1161, %v1159
        %v1224 = vpack.c.b16 %v1162, %v1160
        %v1225 = vpack.c.b16 %v1165, %v1163
        %v1226 = vpack.c.b16 %v1166, %v1164
        %v1227 = vpack.c.b16 %v1169, %v1167
        %v1228 = vpack.c.b16 %v1170, %v1168
        %v1229 = vpack.c.b16 %v1173, %v1171
        %v1230 = vpack.c.b16 %v1174, %v1172
        %v1231 = vpack.c.b16 %v1177, %v1175
        %v1232 = vpack.c.b16 %v1178, %v1176
        %v1233 = vpack.c.b16 %v1181, %v1179
        %v1234 = vpack.c.b16 %v1182, %v1180
        %v1235 = vpack.c.b16 %v1185, %v1183
        %v1236 = vpack.c.b16 %v1186, %v1184
        %v1237 = vpack.c.b16 %v1189, %v1187
        %v1238 = vpack.c.b16 %v1190, %v1188
        %v1239 = vpack.c.b16 %v1193, %v1191
        %v1240 = vpack.c.b16 %v1194, %v1192
        %v1241 = vpack.c.b16 %v1197, %v1195
        %v1242 = vpack.c.b16 %v1198, %v1196
        %v1243 = vpack.c.b16 %v1201, %v1199
        %v1244 = vpack.c.b16 %v1202, %v1200
        %v1245 = vpack.c.b16 %v1205, %v1203
        %v1246 = vpack.c.b16 %v1206, %v1204
        %v1247 = vpack.c.b16 %v1209, %v1207
        %v1248 = vpack.c.b16 %v1210, %v1208
        %v1249 = vpack.c.b16 %v1213, %v1211
        %v1250 = vpack.c.b16 %v1214, %v1212
        %v1251 = vpack.c.b16 %v1217, %v1215
        %v1252 = vpack.c.b16 %v1218, %v1216
        %v1253 = vpack.c.b16 %v1221, %v1219
        %v1254 = vpack.c.b16 %v1222, %v1220
        %1287 = vmatprep.subr.bf16.mxu0 %v1224
        %1288 = vmatpush1.bf16.msra.mxu0 %v1223
        %1289 = vmatprep.subr.bf16.mxu0 %v1226
        %1290 = vmatpush1.bf16.msra.mxu0 %v1225
        %1291 = vmatprep.subr.bf16.mxu0 %v1228
        %1292 = vmatpush1.bf16.msra.mxu0 %v1227
        %1293 = vmatprep.subr.bf16.mxu0 %v1230
        %1294 = vmatpush1.bf16.msra.mxu0 %v1229
        %1295 = vmatprep.subr.bf16.mxu0 %v1232
        %1296 = vmatpush1.bf16.msra.mxu0 %v1231
        %1297 = vmatprep.subr.bf16.mxu0 %v1234
        %1298 = vmatpush1.bf16.msra.mxu0 %v1233
        %1299 = vmatprep.subr.bf16.mxu0 %v1236
        %1300 = vmatpush1.bf16.msra.mxu0 %v1235
        %1301 = vmatprep.subr.bf16.mxu0 %v1238
        %1302 = vmatpush1.bf16.msra.mxu0 %v1237
        %1303 = vmatprep.subr.bf16.mxu0 %v1240
        %1304 = vmatpush1.bf16.msra.mxu0 %v1239
        %1305 = vmatprep.subr.bf16.mxu0 %v1242
        %1306 = vmatpush1.bf16.msra.mxu0 %v1241
        %1307 = vmatprep.subr.bf16.mxu0 %v1244
        %1308 = vmatpush1.bf16.msra.mxu0 %v1243
        %1309 = vmatprep.subr.bf16.mxu0 %v1246
        %1310 = vmatpush1.bf16.msra.mxu0 %v1245
        %1311 = vmatprep.subr.bf16.mxu0 %v1248
        %1312 = vmatpush1.bf16.msra.mxu0 %v1247
        %1313 = vmatprep.subr.bf16.mxu0 %v1250
        %1314 = vmatpush1.bf16.msra.mxu0 %v1249
        %1315 = vmatprep.subr.bf16.mxu0 %v1252
        %1316 = vmatpush1.bf16.msra.mxu0 %v1251
        %1317 = vmatprep.subr.bf16.mxu0 %v1254
        %1318 = vmatpush1.bf16.msra.mxu0 %v1253
        %1319 = vmatprep.mubr.bf16.mxu0 %v1089
        %1320 = vmatmul.mubr.bf16.gmra.mrb[0].mxu0 %v1088
        %v1321 = vpop.f32.mrb[0].mxu0
        %v1322 = vadd.f32 0.0, %v1321
        %v1323 = vpop.f32.mrb[0].mxu0
        %v1324 = vadd.f32 0.0, %v1323
        %v1325 = vpop.f32.mrb[0].mxu0
        %v1326 = vpop.f32.mrb[0].mxu0
        %1327 = vdwg.mxu0
        %v1328 = vpack.c.bf16 %v1322, %v1322
        %v1329 = vpack.c.bf16 %v1324, %v1324
        %v1331 = vlaneseq
        %v1332 = vshrl.u32 %v1331, 7
        %v1333 = vsub.s32 0, %v1332
        %v1334 = vrot.slane %v1124, %v1333
        %v1335 = vlaneseq
        %v1336 = vshrl.u32 %v1335, 7
        %v1337 = vsub.s32 1, %v1336
        %v1338 = vrot.slane %v1124, %v1337
        %v1341 = vpack.c.bf16 %v1334, %v1334
        %v1342 = vpack.c.bf16 %v1338, %v1338
        %v1344 = vpack.i.b16 %v1341, %v1341
        %v1346 = vlaneseq
        %v1347 = vshrl.u32 %v1346, 7
        %v1348 = vsub.s32 0, %v1347
        %v1349 = vrot.slane %v1344, %v1348
        %v1351 = vpack.i.b16 %v1342, %v1342
        %v1353 = vlaneseq
        %v1354 = vshrl.u32 %v1353, 7
        %v1355 = vsub.s32 0, %v1354
        %v1356 = vrot.slane %v1351, %v1355
        %v1357 = vadd.bf16 %v1328, %v1349
        %v1358 = vadd.bf16 %v1329, %v1356
        %vm1359 = vcmp.gt.bf16.partialorder %v1357, 0
        %vm1360 = vcmp.gt.bf16.partialorder %v1358, 0
        %v1362 = vlaneseq
        %v1363 = vshrl.u32 %v1362, 7
        %v1364 = vsub.s32 0, %v1363
        %v1365 = vrot.slane %v1126, %v1364
        %v1366 = vlaneseq
        %v1367 = vshrl.u32 %v1366, 7
        %v1368 = vsub.s32 1, %v1367
        %v1369 = vrot.slane %v1126, %v1368
        %v1372 = vpack.c.bf16 %v1365, %v1365
        %v1373 = vpack.c.bf16 %v1369, %v1369
        %v1375 = vpack.i.b16 %v1372, %v1372
        %v1377 = vlaneseq
        %v1378 = vshrl.u32 %v1377, 7
        %v1379 = vsub.s32 0, %v1378
        %v1380 = vrot.slane %v1375, %v1379
        %v1382 = vpack.i.b16 %v1373, %v1373
        %v1384 = vlaneseq
        %v1385 = vshrl.u32 %v1384, 7
        %v1386 = vsub.s32 0, %v1385
        %v1387 = vrot.slane %v1382, %v1386
        %v1388 = vmul.bf16 %v1380, %v1357
        %v1389 = vmul.bf16 %v1387, %v1358
        %v1390 = vsel %vm1359, %v1357, %v1388
        %v1391 = vsel %vm1360, %v1358, %v1389
        %v1392 = vadd.bf16 %v1390, %v788
        %v1393 = vadd.bf16 %v1391, %v789
        %s1394 = scalar_lea.vmem %s470, 512 [#allocation6]
        %v1395 = vld [vmem:[%s1394] sm:$0xff]
        %v1396 = vld [vmem:[%s1394 + $0x8] sm:$0xff]
        %v1397 = vld [vmem:[%s1394 + $0x10] sm:$0xff]
        %v1398 = vld [vmem:[%s1394 + $0x18] sm:$0xff]
        %v1399 = vld [vmem:[%s1394 + $0x20] sm:$0xff]
        %v1400 = vld [vmem:[%s1394 + $0x28] sm:$0xff]
        %v1401 = vld [vmem:[%s1394 + $0x30] sm:$0xff]
        %v1402 = vld [vmem:[%s1394 + $0x38] sm:$0xff]
        %v1403 = vld [vmem:[%s1394 + $0x40] sm:$0xff]
        %v1404 = vld [vmem:[%s1394 + $0x48] sm:$0xff]
        %v1405 = vld [vmem:[%s1394 + $0x50] sm:$0xff]
        %v1406 = vld [vmem:[%s1394 + $0x58] sm:$0xff]
        %v1407 = vld [vmem:[%s1394 + $0x60] sm:$0xff]
        %v1408 = vld [vmem:[%s1394 + $0x68] sm:$0xff]
        %v1409 = vld [vmem:[%s1394 + $0x70] sm:$0xff]
        %v1410 = vld [vmem:[%s1394 + $0x78] sm:$0xff]
        %v1411 = vld [vmem:[%s1394 + $0x80] sm:$0xff]
        %v1412 = vld [vmem:[%s1394 + $0x88] sm:$0xff]
        %v1413 = vld [vmem:[%s1394 + $0x90] sm:$0xff]
        %v1414 = vld [vmem:[%s1394 + $0x98] sm:$0xff]
        %v1415 = vld [vmem:[%s1394 + $0xa0] sm:$0xff]
        %v1416 = vld [vmem:[%s1394 + $0xa8] sm:$0xff]
        %v1417 = vld [vmem:[%s1394 + $0xb0] sm:$0xff]
        %v1418 = vld [vmem:[%s1394 + $0xb8] sm:$0xff]
        %v1419 = vld [vmem:[%s1394 + $0xc0] sm:$0xff]
        %v1420 = vld [vmem:[%s1394 + $0xc8] sm:$0xff]
        %v1421 = vld [vmem:[%s1394 + $0xd0] sm:$0xff]
        %v1422 = vld [vmem:[%s1394 + $0xd8] sm:$0xff]
        %v1423 = vld [vmem:[%s1394 + $0xe0] sm:$0xff]
        %v1424 = vld [vmem:[%s1394 + $0xe8] sm:$0xff]
        %v1425 = vld [vmem:[%s1394 + $0xf0] sm:$0xff]
        %v1426 = vld [vmem:[%s1394 + $0xf8] sm:$0xff]
        %s1427 = scalar_lea.vmem %s479, 4 [#allocation7]
        %v1428 = vld [vmem:[%s1427] sm:$0x3]
        %s1429 = scalar_lea.vmem %s505, 6 [#allocation12]
        %v1430 = vld [vmem:[%s1429] sm:$0x3]
        %v1463 = vunpack.c.l.b16 %v1395
        %v1464 = vunpack.c.h.b16 %v1395
        %v1465 = vunpack.c.l.b16 %v1396
        %v1466 = vunpack.c.h.b16 %v1396
        %v1467 = vunpack.c.l.b16 %v1397
        %v1468 = vunpack.c.h.b16 %v1397
        %v1469 = vunpack.c.l.b16 %v1398
        %v1470 = vunpack.c.h.b16 %v1398
        %v1471 = vunpack.c.l.b16 %v1399
        %v1472 = vunpack.c.h.b16 %v1399
        %v1473 = vunpack.c.l.b16 %v1400
        %v1474 = vunpack.c.h.b16 %v1400
        %v1475 = vunpack.c.l.b16 %v1401
        %v1476 = vunpack.c.h.b16 %v1401
        %v1477 = vunpack.c.l.b16 %v1402
        %v1478 = vunpack.c.h.b16 %v1402
        %v1479 = vunpack.c.l.b16 %v1403
        %v1480 = vunpack.c.h.b16 %v1403
        %v1481 = vunpack.c.l.b16 %v1404
        %v1482 = vunpack.c.h.b16 %v1404
        %v1483 = vunpack.c.l.b16 %v1405
        %v1484 = vunpack.c.h.b16 %v1405
        %v1485 = vunpack.c.l.b16 %v1406
        %v1486 = vunpack.c.h.b16 %v1406
        %v1487 = vunpack.c.l.b16 %v1407
        %v1488 = vunpack.c.h.b16 %v1407
        %v1489 = vunpack.c.l.b16 %v1408
        %v1490 = vunpack.c.h.b16 %v1408
        %v1491 = vunpack.c.l.b16 %v1409
        %v1492 = vunpack.c.h.b16 %v1409
        %v1493 = vunpack.c.l.b16 %v1410
        %v1494 = vunpack.c.h.b16 %v1410
        %v1495 = vunpack.c.l.b16 %v1411
        %v1496 = vunpack.c.h.b16 %v1411
        %v1497 = vunpack.c.l.b16 %v1412
        %v1498 = vunpack.c.h.b16 %v1412
        %v1499 = vunpack.c.l.b16 %v1413
        %v1500 = vunpack.c.h.b16 %v1413
        %v1501 = vunpack.c.l.b16 %v1414
        %v1502 = vunpack.c.h.b16 %v1414
        %v1503 = vunpack.c.l.b16 %v1415
        %v1504 = vunpack.c.h.b16 %v1415
        %v1505 = vunpack.c.l.b16 %v1416
        %v1506 = vunpack.c.h.b16 %v1416
        %v1507 = vunpack.c.l.b16 %v1417
        %v1508 = vunpack.c.h.b16 %v1417
        %v1509 = vunpack.c.l.b16 %v1418
        %v1510 = vunpack.c.h.b16 %v1418
        %v1511 = vunpack.c.l.b16 %v1419
        %v1512 = vunpack.c.h.b16 %v1419
        %v1513 = vunpack.c.l.b16 %v1420
        %v1514 = vunpack.c.h.b16 %v1420
        %v1515 = vunpack.c.l.b16 %v1421
        %v1516 = vunpack.c.h.b16 %v1421
        %v1517 = vunpack.c.l.b16 %v1422
        %v1518 = vunpack.c.h.b16 %v1422
        %v1519 = vunpack.c.l.b16 %v1423
        %v1520 = vunpack.c.h.b16 %v1423
        %v1521 = vunpack.c.l.b16 %v1424
        %v1522 = vunpack.c.h.b16 %v1424
        %v1523 = vunpack.c.l.b16 %v1425
        %v1524 = vunpack.c.h.b16 %v1425
        %v1525 = vunpack.c.l.b16 %v1426
        %v1526 = vunpack.c.h.b16 %v1426
        %v1527 = vpack.c.b16 %v1465, %v1463
        %v1528 = vpack.c.b16 %v1466, %v1464
        %v1529 = vpack.c.b16 %v1469, %v1467
        %v1530 = vpack.c.b16 %v1470, %v1468
        %v1531 = vpack.c.b16 %v1473, %v1471
        %v1532 = vpack.c.b16 %v1474, %v1472
        %v1533 = vpack.c.b16 %v1477, %v1475
        %v1534 = vpack.c.b16 %v1478, %v1476
        %v1535 = vpack.c.b16 %v1481, %v1479
        %v1536 = vpack.c.b16 %v1482, %v1480
        %v1537 = vpack.c.b16 %v1485, %v1483
        %v1538 = vpack.c.b16 %v1486, %v1484
        %v1539 = vpack.c.b16 %v1489, %v1487
        %v1540 = vpack.c.b16 %v1490, %v1488
        %v1541 = vpack.c.b16 %v1493, %v1491
        %v1542 = vpack.c.b16 %v1494, %v1492
        %v1543 = vpack.c.b16 %v1497, %v1495
        %v1544 = vpack.c.b16 %v1498, %v1496
        %v1545 = vpack.c.b16 %v1501, %v1499
        %v1546 = vpack.c.b16 %v1502, %v1500
        %v1547 = vpack.c.b16 %v1505, %v1503
        %v1548 = vpack.c.b16 %v1506, %v1504
        %v1549 = vpack.c.b16 %v1509, %v1507
        %v1550 = vpack.c.b16 %v1510, %v1508
        %v1551 = vpack.c.b16 %v1513, %v1511
        %v1552 = vpack.c.b16 %v1514, %v1512
        %v1553 = vpack.c.b16 %v1517, %v1515
        %v1554 = vpack.c.b16 %v1518, %v1516
        %v1555 = vpack.c.b16 %v1521, %v1519
        %v1556 = vpack.c.b16 %v1522, %v1520
        %v1557 = vpack.c.b16 %v1525, %v1523
        %v1558 = vpack.c.b16 %v1526, %v1524
        %1591 = vmatprep.subr.bf16.mxu0 %v1528
        %1592 = vmatpush1.bf16.msra.mxu0 %v1527
        %1593 = vmatprep.subr.bf16.mxu0 %v1530
        %1594 = vmatpush1.bf16.msra.mxu0 %v1529
        %1595 = vmatprep.subr.bf16.mxu0 %v1532
        %1596 = vmatpush1.bf16.msra.mxu0 %v1531
        %1597 = vmatprep.subr.bf16.mxu0 %v1534
        %1598 = vmatpush1.bf16.msra.mxu0 %v1533
        %1599 = vmatprep.subr.bf16.mxu0 %v1536
        %1600 = vmatpush1.bf16.msra.mxu0 %v1535
        %1601 = vmatprep.subr.bf16.mxu0 %v1538
        %1602 = vmatpush1.bf16.msra.mxu0 %v1537
        %1603 = vmatprep.subr.bf16.mxu0 %v1540
        %1604 = vmatpush1.bf16.msra.mxu0 %v1539
        %1605 = vmatprep.subr.bf16.mxu0 %v1542
        %1606 = vmatpush1.bf16.msra.mxu0 %v1541
        %1607 = vmatprep.subr.bf16.mxu0 %v1544
        %1608 = vmatpush1.bf16.msra.mxu0 %v1543
        %1609 = vmatprep.subr.bf16.mxu0 %v1546
        %1610 = vmatpush1.bf16.msra.mxu0 %v1545
        %1611 = vmatprep.subr.bf16.mxu0 %v1548
        %1612 = vmatpush1.bf16.msra.mxu0 %v1547
        %1613 = vmatprep.subr.bf16.mxu0 %v1550
        %1614 = vmatpush1.bf16.msra.mxu0 %v1549
        %1615 = vmatprep.subr.bf16.mxu0 %v1552
        %1616 = vmatpush1.bf16.msra.mxu0 %v1551
        %1617 = vmatprep.subr.bf16.mxu0 %v1554
        %1618 = vmatpush1.bf16.msra.mxu0 %v1553
        %1619 = vmatprep.subr.bf16.mxu0 %v1556
        %1620 = vmatpush1.bf16.msra.mxu0 %v1555
        %1621 = vmatprep.subr.bf16.mxu0 %v1558
        %1622 = vmatpush1.bf16.msra.mxu0 %v1557
        %1623 = vmatprep.mubr.bf16.mxu0 %v1393
        %1624 = vmatmul.mubr.bf16.gmra.mrb[0].mxu0 %v1392
        %v1625 = vpop.f32.mrb[0].mxu0
        %v1626 = vadd.f32 0.0, %v1625
        %v1627 = vpop.f32.mrb[0].mxu0
        %v1628 = vadd.f32 0.0, %v1627
        %v1629 = vpop.f32.mrb[0].mxu0
        %v1630 = vpop.f32.mrb[0].mxu0
        %1631 = vdwg.mxu0
        %v1632 = vpack.c.bf16 %v1626, %v1626
        %v1633 = vpack.c.bf16 %v1628, %v1628
        %v1635 = vlaneseq
        %v1636 = vshrl.u32 %v1635, 7
        %v1637 = vsub.s32 0, %v1636
        %v1638 = vrot.slane %v1428, %v1637
        %v1639 = vlaneseq
        %v1640 = vshrl.u32 %v1639, 7
        %v1641 = vsub.s32 1, %v1640
        %v1642 = vrot.slane %v1428, %v1641
        %v1645 = vpack.c.bf16 %v1638, %v1638
        %v1646 = vpack.c.bf16 %v1642, %v1642
        %v1648 = vpack.i.b16 %v1645, %v1645
        %v1650 = vlaneseq
        %v1651 = vshrl.u32 %v1650, 7
        %v1652 = vsub.s32 0, %v1651
        %v1653 = vrot.slane %v1648, %v1652
        %v1655 = vpack.i.b16 %v1646, %v1646
        %v1657 = vlaneseq
        %v1658 = vshrl.u32 %v1657, 7
        %v1659 = vsub.s32 0, %v1658
        %v1660 = vrot.slane %v1655, %v1659
        %v1661 = vadd.bf16 %v1632, %v1653
        %v1662 = vadd.bf16 %v1633, %v1660
        %vm1663 = vcmp.gt.bf16.partialorder %v1661, 0
        %vm1664 = vcmp.gt.bf16.partialorder %v1662, 0
        %v1666 = vlaneseq
        %v1667 = vshrl.u32 %v1666, 7
        %v1668 = vsub.s32 0, %v1667
        %v1669 = vrot.slane %v1430, %v1668
        %v1670 = vlaneseq
        %v1671 = vshrl.u32 %v1670, 7
        %v1672 = vsub.s32 1, %v1671
        %v1673 = vrot.slane %v1430, %v1672
        %v1676 = vpack.c.bf16 %v1669, %v1669
        %v1677 = vpack.c.bf16 %v1673, %v1673
        %v1679 = vpack.i.b16 %v1676, %v1676
        %v1681 = vlaneseq
        %v1682 = vshrl.u32 %v1681, 7
        %v1683 = vsub.s32 0, %v1682
        %v1684 = vrot.slane %v1679, %v1683
        %v1686 = vpack.i.b16 %v1677, %v1677
        %v1688 = vlaneseq
        %v1689 = vshrl.u32 %v1688, 7
        %v1690 = vsub.s32 0, %v1689
        %v1691 = vrot.slane %v1686, %v1690
        %v1692 = vmul.bf16 %v1684, %v1661
        %v1693 = vmul.bf16 %v1691, %v1662
        %v1694 = vsel %vm1663, %v1661, %v1692
        %v1695 = vsel %vm1664, %v1662, %v1693
        %s1696 = scalar_lea.vmem %s470, 768 [#allocation6]
        %v1697 = vld [vmem:[%s1696] sm:$0xff]
        %v1698 = vld [vmem:[%s1696 + $0x8] sm:$0xff]
        %v1699 = vld [vmem:[%s1696 + $0x10] sm:$0xff]
        %v1700 = vld [vmem:[%s1696 + $0x18] sm:$0xff]
        %v1701 = vld [vmem:[%s1696 + $0x20] sm:$0xff]
        %v1702 = vld [vmem:[%s1696 + $0x28] sm:$0xff]
        %v1703 = vld [vmem:[%s1696 + $0x30] sm:$0xff]
        %v1704 = vld [vmem:[%s1696 + $0x38] sm:$0xff]
        %v1705 = vld [vmem:[%s1696 + $0x40] sm:$0xff]
        %v1706 = vld [vmem:[%s1696 + $0x48] sm:$0xff]
        %v1707 = vld [vmem:[%s1696 + $0x50] sm:$0xff]
        %v1708 = vld [vmem:[%s1696 + $0x58] sm:$0xff]
        %v1709 = vld [vmem:[%s1696 + $0x60] sm:$0xff]
        %v1710 = vld [vmem:[%s1696 + $0x68] sm:$0xff]
        %v1711 = vld [vmem:[%s1696 + $0x70] sm:$0xff]
        %v1712 = vld [vmem:[%s1696 + $0x78] sm:$0xff]
        %v1713 = vld [vmem:[%s1696 + $0x80] sm:$0xff]
        %v1714 = vld [vmem:[%s1696 + $0x88] sm:$0xff]
        %v1715 = vld [vmem:[%s1696 + $0x90] sm:$0xff]
        %v1716 = vld [vmem:[%s1696 + $0x98] sm:$0xff]
        %v1717 = vld [vmem:[%s1696 + $0xa0] sm:$0xff]
        %v1718 = vld [vmem:[%s1696 + $0xa8] sm:$0xff]
        %v1719 = vld [vmem:[%s1696 + $0xb0] sm:$0xff]
        %v1720 = vld [vmem:[%s1696 + $0xb8] sm:$0xff]
        %v1721 = vld [vmem:[%s1696 + $0xc0] sm:$0xff]
        %v1722 = vld [vmem:[%s1696 + $0xc8] sm:$0xff]
        %v1723 = vld [vmem:[%s1696 + $0xd0] sm:$0xff]
        %v1724 = vld [vmem:[%s1696 + $0xd8] sm:$0xff]
        %v1725 = vld [vmem:[%s1696 + $0xe0] sm:$0xff]
        %v1726 = vld [vmem:[%s1696 + $0xe8] sm:$0xff]
        %v1727 = vld [vmem:[%s1696 + $0xf0] sm:$0xff]
        %v1728 = vld [vmem:[%s1696 + $0xf8] sm:$0xff]
        %s1729 = scalar_lea.vmem %s479, 6 [#allocation7]
        %v1730 = vld [vmem:[%s1729] sm:$0x3]
        %s1731 = scalar_lea.vmem %s505, 8 [#allocation12]
        %v1732 = vld [vmem:[%s1731] sm:$0x3]
        %v1765 = vunpack.c.l.b16 %v1697
        %v1766 = vunpack.c.h.b16 %v1697
        %v1767 = vunpack.c.l.b16 %v1698
        %v1768 = vunpack.c.h.b16 %v1698
        %v1769 = vunpack.c.l.b16 %v1699
        %v1770 = vunpack.c.h.b16 %v1699
        %v1771 = vunpack.c.l.b16 %v1700
        %v1772 = vunpack.c.h.b16 %v1700
        %v1773 = vunpack.c.l.b16 %v1701
        %v1774 = vunpack.c.h.b16 %v1701
        %v1775 = vunpack.c.l.b16 %v1702
        %v1776 = vunpack.c.h.b16 %v1702
        %v1777 = vunpack.c.l.b16 %v1703
        %v1778 = vunpack.c.h.b16 %v1703
        %v1779 = vunpack.c.l.b16 %v1704
        %v1780 = vunpack.c.h.b16 %v1704
        %v1781 = vunpack.c.l.b16 %v1705
        %v1782 = vunpack.c.h.b16 %v1705
        %v1783 = vunpack.c.l.b16 %v1706
        %v1784 = vunpack.c.h.b16 %v1706
        %v1785 = vunpack.c.l.b16 %v1707
        %v1786 = vunpack.c.h.b16 %v1707
        %v1787 = vunpack.c.l.b16 %v1708
        %v1788 = vunpack.c.h.b16 %v1708
        %v1789 = vunpack.c.l.b16 %v1709
        %v1790 = vunpack.c.h.b16 %v1709
        %v1791 = vunpack.c.l.b16 %v1710
        %v1792 = vunpack.c.h.b16 %v1710
        %v1793 = vunpack.c.l.b16 %v1711
        %v1794 = vunpack.c.h.b16 %v1711
        %v1795 = vunpack.c.l.b16 %v1712
        %v1796 = vunpack.c.h.b16 %v1712
        %v1797 = vunpack.c.l.b16 %v1713
        %v1798 = vunpack.c.h.b16 %v1713
        %v1799 = vunpack.c.l.b16 %v1714
        %v1800 = vunpack.c.h.b16 %v1714
        %v1801 = vunpack.c.l.b16 %v1715
        %v1802 = vunpack.c.h.b16 %v1715
        %v1803 = vunpack.c.l.b16 %v1716
        %v1804 = vunpack.c.h.b16 %v1716
        %v1805 = vunpack.c.l.b16 %v1717
        %v1806 = vunpack.c.h.b16 %v1717
        %v1807 = vunpack.c.l.b16 %v1718
        %v1808 = vunpack.c.h.b16 %v1718
        %v1809 = vunpack.c.l.b16 %v1719
        %v1810 = vunpack.c.h.b16 %v1719
        %v1811 = vunpack.c.l.b16 %v1720
        %v1812 = vunpack.c.h.b16 %v1720
        %v1813 = vunpack.c.l.b16 %v1721
        %v1814 = vunpack.c.h.b16 %v1721
        %v1815 = vunpack.c.l.b16 %v1722
        %v1816 = vunpack.c.h.b16 %v1722
        %v1817 = vunpack.c.l.b16 %v1723
        %v1818 = vunpack.c.h.b16 %v1723
        %v1819 = vunpack.c.l.b16 %v1724
        %v1820 = vunpack.c.h.b16 %v1724
        %v1821 = vunpack.c.l.b16 %v1725
        %v1822 = vunpack.c.h.b16 %v1725
        %v1823 = vunpack.c.l.b16 %v1726
        %v1824 = vunpack.c.h.b16 %v1726
        %v1825 = vunpack.c.l.b16 %v1727
        %v1826 = vunpack.c.h.b16 %v1727
        %v1827 = vunpack.c.l.b16 %v1728
        %v1828 = vunpack.c.h.b16 %v1728
        %v1829 = vpack.c.b16 %v1767, %v1765
        %v1830 = vpack.c.b16 %v1768, %v1766
        %v1831 = vpack.c.b16 %v1771, %v1769
        %v1832 = vpack.c.b16 %v1772, %v1770
        %v1833 = vpack.c.b16 %v1775, %v1773
        %v1834 = vpack.c.b16 %v1776, %v1774
        %v1835 = vpack.c.b16 %v1779, %v1777
        %v1836 = vpack.c.b16 %v1780, %v1778
        %v1837 = vpack.c.b16 %v1783, %v1781
        %v1838 = vpack.c.b16 %v1784, %v1782
        %v1839 = vpack.c.b16 %v1787, %v1785
        %v1840 = vpack.c.b16 %v1788, %v1786
        %v1841 = vpack.c.b16 %v1791, %v1789
        %v1842 = vpack.c.b16 %v1792, %v1790
        %v1843 = vpack.c.b16 %v1795, %v1793
        %v1844 = vpack.c.b16 %v1796, %v1794
        %v1845 = vpack.c.b16 %v1799, %v1797
        %v1846 = vpack.c.b16 %v1800, %v1798
        %v1847 = vpack.c.b16 %v1803, %v1801
        %v1848 = vpack.c.b16 %v1804, %v1802
        %v1849 = vpack.c.b16 %v1807, %v1805
        %v1850 = vpack.c.b16 %v1808, %v1806
        %v1851 = vpack.c.b16 %v1811, %v1809
        %v1852 = vpack.c.b16 %v1812, %v1810
        %v1853 = vpack.c.b16 %v1815, %v1813
        %v1854 = vpack.c.b16 %v1816, %v1814
        %v1855 = vpack.c.b16 %v1819, %v1817
        %v1856 = vpack.c.b16 %v1820, %v1818
        %v1857 = vpack.c.b16 %v1823, %v1821
        %v1858 = vpack.c.b16 %v1824, %v1822
        %v1859 = vpack.c.b16 %v1827, %v1825
        %v1860 = vpack.c.b16 %v1828, %v1826
        %1893 = vmatprep.subr.bf16.mxu0 %v1830
        %1894 = vmatpush1.bf16.msra.mxu0 %v1829
        %1895 = vmatprep.subr.bf16.mxu0 %v1832
        %1896 = vmatpush1.bf16.msra.mxu0 %v1831
        %1897 = vmatprep.subr.bf16.mxu0 %v1834
        %1898 = vmatpush1.bf16.msra.mxu0 %v1833
        %1899 = vmatprep.subr.bf16.mxu0 %v1836
        %1900 = vmatpush1.bf16.msra.mxu0 %v1835
        %1901 = vmatprep.subr.bf16.mxu0 %v1838
        %1902 = vmatpush1.bf16.msra.mxu0 %v1837
        %1903 = vmatprep.subr.bf16.mxu0 %v1840
        %1904 = vmatpush1.bf16.msra.mxu0 %v1839
        %1905 = vmatprep.subr.bf16.mxu0 %v1842
        %1906 = vmatpush1.bf16.msra.mxu0 %v1841
        %1907 = vmatprep.subr.bf16.mxu0 %v1844
        %1908 = vmatpush1.bf16.msra.mxu0 %v1843
        %1909 = vmatprep.subr.bf16.mxu0 %v1846
        %1910 = vmatpush1.bf16.msra.mxu0 %v1845
        %1911 = vmatprep.subr.bf16.mxu0 %v1848
        %1912 = vmatpush1.bf16.msra.mxu0 %v1847
        %1913 = vmatprep.subr.bf16.mxu0 %v1850
        %1914 = vmatpush1.bf16.msra.mxu0 %v1849
        %1915 = vmatprep.subr.bf16.mxu0 %v1852
        %1916 = vmatpush1.bf16.msra.mxu0 %v1851
        %1917 = vmatprep.subr.bf16.mxu0 %v1854
        %1918 = vmatpush1.bf16.msra.mxu0 %v1853
        %1919 = vmatprep.subr.bf16.mxu0 %v1856
        %1920 = vmatpush1.bf16.msra.mxu0 %v1855
        %1921 = vmatprep.subr.bf16.mxu0 %v1858
        %1922 = vmatpush1.bf16.msra.mxu0 %v1857
        %1923 = vmatprep.subr.bf16.mxu0 %v1860
        %1924 = vmatpush1.bf16.msra.mxu0 %v1859
        %1925 = vmatprep.mubr.bf16.mxu0 %v1695
        %1926 = vmatmul.mubr.bf16.gmra.mrb[0].mxu0 %v1694
        %v1927 = vpop.f32.mrb[0].mxu0
        %v1928 = vadd.f32 0.0, %v1927
        %v1929 = vpop.f32.mrb[0].mxu0
        %v1930 = vadd.f32 0.0, %v1929
        %v1931 = vpop.f32.mrb[0].mxu0
        %v1932 = vpop.f32.mrb[0].mxu0
        %1933 = vdwg.mxu0
        %v1934 = vpack.c.bf16 %v1928, %v1928
        %v1935 = vpack.c.bf16 %v1930, %v1930
        %v1937 = vlaneseq
        %v1938 = vshrl.u32 %v1937, 7
        %v1939 = vsub.s32 0, %v1938
        %v1940 = vrot.slane %v1730, %v1939
        %v1941 = vlaneseq
        %v1942 = vshrl.u32 %v1941, 7
        %v1943 = vsub.s32 1, %v1942
        %v1944 = vrot.slane %v1730, %v1943
        %v1947 = vpack.c.bf16 %v1940, %v1940
        %v1948 = vpack.c.bf16 %v1944, %v1944
        %v1950 = vpack.i.b16 %v1947, %v1947
        %v1952 = vlaneseq
        %v1953 = vshrl.u32 %v1952, 7
        %v1954 = vsub.s32 0, %v1953
        %v1955 = vrot.slane %v1950, %v1954
        %v1957 = vpack.i.b16 %v1948, %v1948
        %v1959 = vlaneseq
        %v1960 = vshrl.u32 %v1959, 7
        %v1961 = vsub.s32 0, %v1960
        %v1962 = vrot.slane %v1957, %v1961
        %v1963 = vadd.bf16 %v1934, %v1955
        %v1964 = vadd.bf16 %v1935, %v1962
        %vm1965 = vcmp.gt.bf16.partialorder %v1963, 0
        %vm1966 = vcmp.gt.bf16.partialorder %v1964, 0
        %v1968 = vlaneseq
        %v1969 = vshrl.u32 %v1968, 7
        %v1970 = vsub.s32 0, %v1969
        %v1971 = vrot.slane %v1732, %v1970
        %v1972 = vlaneseq
        %v1973 = vshrl.u32 %v1972, 7
        %v1974 = vsub.s32 1, %v1973
        %v1975 = vrot.slane %v1732, %v1974
        %v1978 = vpack.c.bf16 %v1971, %v1971
        %v1979 = vpack.c.bf16 %v1975, %v1975
        %v1981 = vpack.i.b16 %v1978, %v1978
        %v1983 = vlaneseq
        %v1984 = vshrl.u32 %v1983, 7
        %v1985 = vsub.s32 0, %v1984
        %v1986 = vrot.slane %v1981, %v1985
        %v1988 = vpack.i.b16 %v1979, %v1979
        %v1990 = vlaneseq
        %v1991 = vshrl.u32 %v1990, 7
        %v1992 = vsub.s32 0, %v1991
        %v1993 = vrot.slane %v1988, %v1992
        %v1994 = vmul.bf16 %v1986, %v1963
        %v1995 = vmul.bf16 %v1993, %v1964
        %v1996 = vsel %vm1965, %v1963, %v1994
        %v1997 = vsel %vm1966, %v1964, %v1995
        %v1998 = vadd.bf16 %v1996, %v1392
        %v1999 = vadd.bf16 %v1997, %v1393
        %s2000 = scalar_lea.vmem %s470, 1024 [#allocation6]
        %v2001 = vld [vmem:[%s2000] sm:$0xff]
        %v2002 = vld [vmem:[%s2000 + $0x8] sm:$0xff]
        %v2003 = vld [vmem:[%s2000 + $0x10] sm:$0xff]
        %v2004 = vld [vmem:[%s2000 + $0x18] sm:$0xff]
        %v2005 = vld [vmem:[%s2000 + $0x20] sm:$0xff]
        %v2006 = vld [vmem:[%s2000 + $0x28] sm:$0xff]
        %v2007 = vld [vmem:[%s2000 + $0x30] sm:$0xff]
        %v2008 = vld [vmem:[%s2000 + $0x38] sm:$0xff]
        %v2009 = vld [vmem:[%s2000 + $0x40] sm:$0xff]
        %v2010 = vld [vmem:[%s2000 + $0x48] sm:$0xff]
        %v2011 = vld [vmem:[%s2000 + $0x50] sm:$0xff]
        %v2012 = vld [vmem:[%s2000 + $0x58] sm:$0xff]
        %v2013 = vld [vmem:[%s2000 + $0x60] sm:$0xff]
        %v2014 = vld [vmem:[%s2000 + $0x68] sm:$0xff]
        %v2015 = vld [vmem:[%s2000 + $0x70] sm:$0xff]
        %v2016 = vld [vmem:[%s2000 + $0x78] sm:$0xff]
        %v2017 = vld [vmem:[%s2000 + $0x80] sm:$0xff]
        %v2018 = vld [vmem:[%s2000 + $0x88] sm:$0xff]
        %v2019 = vld [vmem:[%s2000 + $0x90] sm:$0xff]
        %v2020 = vld [vmem:[%s2000 + $0x98] sm:$0xff]
        %v2021 = vld [vmem:[%s2000 + $0xa0] sm:$0xff]
        %v2022 = vld [vmem:[%s2000 + $0xa8] sm:$0xff]
        %v2023 = vld [vmem:[%s2000 + $0xb0] sm:$0xff]
        %v2024 = vld [vmem:[%s2000 + $0xb8] sm:$0xff]
        %v2025 = vld [vmem:[%s2000 + $0xc0] sm:$0xff]
        %v2026 = vld [vmem:[%s2000 + $0xc8] sm:$0xff]
        %v2027 = vld [vmem:[%s2000 + $0xd0] sm:$0xff]
        %v2028 = vld [vmem:[%s2000 + $0xd8] sm:$0xff]
        %v2029 = vld [vmem:[%s2000 + $0xe0] sm:$0xff]
        %v2030 = vld [vmem:[%s2000 + $0xe8] sm:$0xff]
        %v2031 = vld [vmem:[%s2000 + $0xf0] sm:$0xff]
        %v2032 = vld [vmem:[%s2000 + $0xf8] sm:$0xff]
        %s2033 = scalar_lea.vmem %s479, 8 [#allocation7]
        %v2034 = vld [vmem:[%s2033] sm:$0x3]
        %s2035 = scalar_lea.vmem %s505, 10 [#allocation12]
        %v2036 = vld [vmem:[%s2035] sm:$0x3]
        %v2069 = vunpack.c.l.b16 %v2001
        %v2070 = vunpack.c.h.b16 %v2001
        %v2071 = vunpack.c.l.b16 %v2002
        %v2072 = vunpack.c.h.b16 %v2002
        %v2073 = vunpack.c.l.b16 %v2003
        %v2074 = vunpack.c.h.b16 %v2003
        %v2075 = vunpack.c.l.b16 %v2004
        %v2076 = vunpack.c.h.b16 %v2004
        %v2077 = vunpack.c.l.b16 %v2005
        %v2078 = vunpack.c.h.b16 %v2005
        %v2079 = vunpack.c.l.b16 %v2006
        %v2080 = vunpack.c.h.b16 %v2006
        %v2081 = vunpack.c.l.b16 %v2007
        %v2082 = vunpack.c.h.b16 %v2007
        %v2083 = vunpack.c.l.b16 %v2008
        %v2084 = vunpack.c.h.b16 %v2008
        %v2085 = vunpack.c.l.b16 %v2009
        %v2086 = vunpack.c.h.b16 %v2009
        %v2087 = vunpack.c.l.b16 %v2010
        %v2088 = vunpack.c.h.b16 %v2010
        %v2089 = vunpack.c.l.b16 %v2011
        %v2090 = vunpack.c.h.b16 %v2011
        %v2091 = vunpack.c.l.b16 %v2012
        %v2092 = vunpack.c.h.b16 %v2012
        %v2093 = vunpack.c.l.b16 %v2013
        %v2094 = vunpack.c.h.b16 %v2013
        %v2095 = vunpack.c.l.b16 %v2014
        %v2096 = vunpack.c.h.b16 %v2014
        %v2097 = vunpack.c.l.b16 %v2015
        %v2098 = vunpack.c.h.b16 %v2015
        %v2099 = vunpack.c.l.b16 %v2016
        %v2100 = vunpack.c.h.b16 %v2016
        %v2101 = vunpack.c.l.b16 %v2017
        %v2102 = vunpack.c.h.b16 %v2017
        %v2103 = vunpack.c.l.b16 %v2018
        %v2104 = vunpack.c.h.b16 %v2018
        %v2105 = vunpack.c.l.b16 %v2019
        %v2106 = vunpack.c.h.b16 %v2019
        %v2107 = vunpack.c.l.b16 %v2020
        %v2108 = vunpack.c.h.b16 %v2020
        %v2109 = vunpack.c.l.b16 %v2021
        %v2110 = vunpack.c.h.b16 %v2021
        %v2111 = vunpack.c.l.b16 %v2022
        %v2112 = vunpack.c.h.b16 %v2022
        %v2113 = vunpack.c.l.b16 %v2023
        %v2114 = vunpack.c.h.b16 %v2023
        %v2115 = vunpack.c.l.b16 %v2024
        %v2116 = vunpack.c.h.b16 %v2024
        %v2117 = vunpack.c.l.b16 %v2025
        %v2118 = vunpack.c.h.b16 %v2025
        %v2119 = vunpack.c.l.b16 %v2026
        %v2120 = vunpack.c.h.b16 %v2026
        %v2121 = vunpack.c.l.b16 %v2027
        %v2122 = vunpack.c.h.b16 %v2027
        %v2123 = vunpack.c.l.b16 %v2028
        %v2124 = vunpack.c.h.b16 %v2028
        %v2125 = vunpack.c.l.b16 %v2029
        %v2126 = vunpack.c.h.b16 %v2029
        %v2127 = vunpack.c.l.b16 %v2030
        %v2128 = vunpack.c.h.b16 %v2030
        %v2129 = vunpack.c.l.b16 %v2031
        %v2130 = vunpack.c.h.b16 %v2031
        %v2131 = vunpack.c.l.b16 %v2032
        %v2132 = vunpack.c.h.b16 %v2032
        %v2133 = vpack.c.b16 %v2071, %v2069
        %v2134 = vpack.c.b16 %v2072, %v2070
        %v2135 = vpack.c.b16 %v2075, %v2073
        %v2136 = vpack.c.b16 %v2076, %v2074
        %v2137 = vpack.c.b16 %v2079, %v2077
        %v2138 = vpack.c.b16 %v2080, %v2078
        %v2139 = vpack.c.b16 %v2083, %v2081
        %v2140 = vpack.c.b16 %v2084, %v2082
        %v2141 = vpack.c.b16 %v2087, %v2085
        %v2142 = vpack.c.b16 %v2088, %v2086
        %v2143 = vpack.c.b16 %v2091, %v2089
        %v2144 = vpack.c.b16 %v2092, %v2090
        %v2145 = vpack.c.b16 %v2095, %v2093
        %v2146 = vpack.c.b16 %v2096, %v2094
        %v2147 = vpack.c.b16 %v2099, %v2097
        %v2148 = vpack.c.b16 %v2100, %v2098
        %v2149 = vpack.c.b16 %v2103, %v2101
        %v2150 = vpack.c.b16 %v2104, %v2102
        %v2151 = vpack.c.b16 %v2107, %v2105
        %v2152 = vpack.c.b16 %v2108, %v2106
        %v2153 = vpack.c.b16 %v2111, %v2109
        %v2154 = vpack.c.b16 %v2112, %v2110
        %v2155 = vpack.c.b16 %v2115, %v2113
        %v2156 = vpack.c.b16 %v2116, %v2114
        %v2157 = vpack.c.b16 %v2119, %v2117
        %v2158 = vpack.c.b16 %v2120, %v2118
        %v2159 = vpack.c.b16 %v2123, %v2121
        %v2160 = vpack.c.b16 %v2124, %v2122
        %v2161 = vpack.c.b16 %v2127, %v2125
        %v2162 = vpack.c.b16 %v2128, %v2126
        %v2163 = vpack.c.b16 %v2131, %v2129
        %v2164 = vpack.c.b16 %v2132, %v2130
        %2197 = vmatprep.subr.bf16.mxu0 %v2134
        %2198 = vmatpush1.bf16.msra.mxu0 %v2133
        %2199 = vmatprep.subr.bf16.mxu0 %v2136
        %2200 = vmatpush1.bf16.msra.mxu0 %v2135
        %2201 = vmatprep.subr.bf16.mxu0 %v2138
        %2202 = vmatpush1.bf16.msra.mxu0 %v2137
        %2203 = vmatprep.subr.bf16.mxu0 %v2140
        %2204 = vmatpush1.bf16.msra.mxu0 %v2139
        %2205 = vmatprep.subr.bf16.mxu0 %v2142
        %2206 = vmatpush1.bf16.msra.mxu0 %v2141
        %2207 = vmatprep.subr.bf16.mxu0 %v2144
        %2208 = vmatpush1.bf16.msra.mxu0 %v2143
        %2209 = vmatprep.subr.bf16.mxu0 %v2146
        %2210 = vmatpush1.bf16.msra.mxu0 %v2145
        %2211 = vmatprep.subr.bf16.mxu0 %v2148
        %2212 = vmatpush1.bf16.msra.mxu0 %v2147
        %2213 = vmatprep.subr.bf16.mxu0 %v2150
        %2214 = vmatpush1.bf16.msra.mxu0 %v2149
        %2215 = vmatprep.subr.bf16.mxu0 %v2152
        %2216 = vmatpush1.bf16.msra.mxu0 %v2151
        %2217 = vmatprep.subr.bf16.mxu0 %v2154
        %2218 = vmatpush1.bf16.msra.mxu0 %v2153
        %2219 = vmatprep.subr.bf16.mxu0 %v2156
        %2220 = vmatpush1.bf16.msra.mxu0 %v2155
        %2221 = vmatprep.subr.bf16.mxu0 %v2158
        %2222 = vmatpush1.bf16.msra.mxu0 %v2157
        %2223 = vmatprep.subr.bf16.mxu0 %v2160
        %2224 = vmatpush1.bf16.msra.mxu0 %v2159
        %2225 = vmatprep.subr.bf16.mxu0 %v2162
        %2226 = vmatpush1.bf16.msra.mxu0 %v2161
        %2227 = vmatprep.subr.bf16.mxu0 %v2164
        %2228 = vmatpush1.bf16.msra.mxu0 %v2163
        %2229 = vmatprep.mubr.bf16.mxu0 %v1999
        %2230 = vmatmul.mubr.bf16.gmra.mrb[0].mxu0 %v1998
        %v2231 = vpop.f32.mrb[0].mxu0
        %v2232 = vadd.f32 0.0, %v2231
        %v2233 = vpop.f32.mrb[0].mxu0
        %v2234 = vadd.f32 0.0, %v2233
        %v2235 = vpop.f32.mrb[0].mxu0
        %v2236 = vpop.f32.mrb[0].mxu0
        %2237 = vdwg.mxu0
        %v2238 = vpack.c.bf16 %v2232, %v2232
        %v2239 = vpack.c.bf16 %v2234, %v2234
        %v2241 = vlaneseq
        %v2242 = vshrl.u32 %v2241, 7
        %v2243 = vsub.s32 0, %v2242
        %v2244 = vrot.slane %v2034, %v2243
        %v2245 = vlaneseq
        %v2246 = vshrl.u32 %v2245, 7
        %v2247 = vsub.s32 1, %v2246
        %v2248 = vrot.slane %v2034, %v2247
        %v2251 = vpack.c.bf16 %v2244, %v2244
        %v2252 = vpack.c.bf16 %v2248, %v2248
        %v2254 = vpack.i.b16 %v2251, %v2251
        %v2256 = vlaneseq
        %v2257 = vshrl.u32 %v2256, 7
        %v2258 = vsub.s32 0, %v2257
        %v2259 = vrot.slane %v2254, %v2258
        %v2261 = vpack.i.b16 %v2252, %v2252
        %v2263 = vlaneseq
        %v2264 = vshrl.u32 %v2263, 7
        %v2265 = vsub.s32 0, %v2264
        %v2266 = vrot.slane %v2261, %v2265
        %v2267 = vadd.bf16 %v2238, %v2259
        %v2268 = vadd.bf16 %v2239, %v2266
        %vm2269 = vcmp.gt.bf16.partialorder %v2267, 0
        %vm2270 = vcmp.gt.bf16.partialorder %v2268, 0
        %v2272 = vlaneseq
        %v2273 = vshrl.u32 %v2272, 7
        %v2274 = vsub.s32 0, %v2273
        %v2275 = vrot.slane %v2036, %v2274
        %v2276 = vlaneseq
        %v2277 = vshrl.u32 %v2276, 7
        %v2278 = vsub.s32 1, %v2277
        %v2279 = vrot.slane %v2036, %v2278
        %v2282 = vpack.c.bf16 %v2275, %v2275
        %v2283 = vpack.c.bf16 %v2279, %v2279
        %v2285 = vpack.i.b16 %v2282, %v2282
        %v2287 = vlaneseq
        %v2288 = vshrl.u32 %v2287, 7
        %v2289 = vsub.s32 0, %v2288
        %v2290 = vrot.slane %v2285, %v2289
        %v2292 = vpack.i.b16 %v2283, %v2283
        %v2294 = vlaneseq
        %v2295 = vshrl.u32 %v2294, 7
        %v2296 = vsub.s32 0, %v2295
        %v2297 = vrot.slane %v2292, %v2296
        %v2298 = vmul.bf16 %v2290, %v2267
        %v2299 = vmul.bf16 %v2297, %v2268
        %v2300 = vsel %vm2269, %v2267, %v2298
        %v2301 = vsel %vm2270, %v2268, %v2299
        %s2302 = scalar_lea.vmem %s470, 1280 [#allocation6]
        %v2303 = vld [vmem:[%s2302] sm:$0xff]
        %v2304 = vld [vmem:[%s2302 + $0x8] sm:$0xff]
        %v2305 = vld [vmem:[%s2302 + $0x10] sm:$0xff]
        %v2306 = vld [vmem:[%s2302 + $0x18] sm:$0xff]
        %v2307 = vld [vmem:[%s2302 + $0x20] sm:$0xff]
        %v2308 = vld [vmem:[%s2302 + $0x28] sm:$0xff]
        %v2309 = vld [vmem:[%s2302 + $0x30] sm:$0xff]
        %v2310 = vld [vmem:[%s2302 + $0x38] sm:$0xff]
        %v2311 = vld [vmem:[%s2302 + $0x40] sm:$0xff]
        %v2312 = vld [vmem:[%s2302 + $0x48] sm:$0xff]
        %v2313 = vld [vmem:[%s2302 + $0x50] sm:$0xff]
        %v2314 = vld [vmem:[%s2302 + $0x58] sm:$0xff]
        %v2315 = vld [vmem:[%s2302 + $0x60] sm:$0xff]
        %v2316 = vld [vmem:[%s2302 + $0x68] sm:$0xff]
        %v2317 = vld [vmem:[%s2302 + $0x70] sm:$0xff]
        %v2318 = vld [vmem:[%s2302 + $0x78] sm:$0xff]
        %v2319 = vld [vmem:[%s2302 + $0x80] sm:$0xff]
        %v2320 = vld [vmem:[%s2302 + $0x88] sm:$0xff]
        %v2321 = vld [vmem:[%s2302 + $0x90] sm:$0xff]
        %v2322 = vld [vmem:[%s2302 + $0x98] sm:$0xff]
        %v2323 = vld [vmem:[%s2302 + $0xa0] sm:$0xff]
        %v2324 = vld [vmem:[%s2302 + $0xa8] sm:$0xff]
        %v2325 = vld [vmem:[%s2302 + $0xb0] sm:$0xff]
        %v2326 = vld [vmem:[%s2302 + $0xb8] sm:$0xff]
        %v2327 = vld [vmem:[%s2302 + $0xc0] sm:$0xff]
        %v2328 = vld [vmem:[%s2302 + $0xc8] sm:$0xff]
        %v2329 = vld [vmem:[%s2302 + $0xd0] sm:$0xff]
        %v2330 = vld [vmem:[%s2302 + $0xd8] sm:$0xff]
        %v2331 = vld [vmem:[%s2302 + $0xe0] sm:$0xff]
        %v2332 = vld [vmem:[%s2302 + $0xe8] sm:$0xff]
        %v2333 = vld [vmem:[%s2302 + $0xf0] sm:$0xff]
        %v2334 = vld [vmem:[%s2302 + $0xf8] sm:$0xff]
        %s2335 = scalar_lea.vmem %s479, 10 [#allocation7]
        %v2336 = vld [vmem:[%s2335] sm:$0x3]
        %s2337 = scalar_lea.vmem %s505, 12 [#allocation12]
        %v2338 = vld [vmem:[%s2337] sm:$0x3]
        %v2371 = vunpack.c.l.b16 %v2303
        %v2372 = vunpack.c.h.b16 %v2303
        %v2373 = vunpack.c.l.b16 %v2304
        %v2374 = vunpack.c.h.b16 %v2304
        %v2375 = vunpack.c.l.b16 %v2305
        %v2376 = vunpack.c.h.b16 %v2305
        %v2377 = vunpack.c.l.b16 %v2306
        %v2378 = vunpack.c.h.b16 %v2306
        %v2379 = vunpack.c.l.b16 %v2307
        %v2380 = vunpack.c.h.b16 %v2307
        %v2381 = vunpack.c.l.b16 %v2308
        %v2382 = vunpack.c.h.b16 %v2308
        %v2383 = vunpack.c.l.b16 %v2309
        %v2384 = vunpack.c.h.b16 %v2309
        %v2385 = vunpack.c.l.b16 %v2310
        %v2386 = vunpack.c.h.b16 %v2310
        %v2387 = vunpack.c.l.b16 %v2311
        %v2388 = vunpack.c.h.b16 %v2311
        %v2389 = vunpack.c.l.b16 %v2312
        %v2390 = vunpack.c.h.b16 %v2312
        %v2391 = vunpack.c.l.b16 %v2313
        %v2392 = vunpack.c.h.b16 %v2313
        %v2393 = vunpack.c.l.b16 %v2314
        %v2394 = vunpack.c.h.b16 %v2314
        %v2395 = vunpack.c.l.b16 %v2315
        %v2396 = vunpack.c.h.b16 %v2315
        %v2397 = vunpack.c.l.b16 %v2316
        %v2398 = vunpack.c.h.b16 %v2316
        %v2399 = vunpack.c.l.b16 %v2317
        %v2400 = vunpack.c.h.b16 %v2317
        %v2401 = vunpack.c.l.b16 %v2318
        %v2402 = vunpack.c.h.b16 %v2318
        %v2403 = vunpack.c.l.b16 %v2319
        %v2404 = vunpack.c.h.b16 %v2319
        %v2405 = vunpack.c.l.b16 %v2320
        %v2406 = vunpack.c.h.b16 %v2320
        %v2407 = vunpack.c.l.b16 %v2321
        %v2408 = vunpack.c.h.b16 %v2321
        %v2409 = vunpack.c.l.b16 %v2322
        %v2410 = vunpack.c.h.b16 %v2322
        %v2411 = vunpack.c.l.b16 %v2323
        %v2412 = vunpack.c.h.b16 %v2323
        %v2413 = vunpack.c.l.b16 %v2324
        %v2414 = vunpack.c.h.b16 %v2324
        %v2415 = vunpack.c.l.b16 %v2325
        %v2416 = vunpack.c.h.b16 %v2325
        %v2417 = vunpack.c.l.b16 %v2326
        %v2418 = vunpack.c.h.b16 %v2326
        %v2419 = vunpack.c.l.b16 %v2327
        %v2420 = vunpack.c.h.b16 %v2327
        %v2421 = vunpack.c.l.b16 %v2328
        %v2422 = vunpack.c.h.b16 %v2328
        %v2423 = vunpack.c.l.b16 %v2329
        %v2424 = vunpack.c.h.b16 %v2329
        %v2425 = vunpack.c.l.b16 %v2330
        %v2426 = vunpack.c.h.b16 %v2330
        %v2427 = vunpack.c.l.b16 %v2331
        %v2428 = vunpack.c.h.b16 %v2331
        %v2429 = vunpack.c.l.b16 %v2332
        %v2430 = vunpack.c.h.b16 %v2332
        %v2431 = vunpack.c.l.b16 %v2333
        %v2432 = vunpack.c.h.b16 %v2333
        %v2433 = vunpack.c.l.b16 %v2334
        %v2434 = vunpack.c.h.b16 %v2334
        %v2435 = vpack.c.b16 %v2373, %v2371
        %v2436 = vpack.c.b16 %v2374, %v2372
        %v2437 = vpack.c.b16 %v2377, %v2375
        %v2438 = vpack.c.b16 %v2378, %v2376
        %v2439 = vpack.c.b16 %v2381, %v2379
        %v2440 = vpack.c.b16 %v2382, %v2380
        %v2441 = vpack.c.b16 %v2385, %v2383
        %v2442 = vpack.c.b16 %v2386, %v2384
        %v2443 = vpack.c.b16 %v2389, %v2387
        %v2444 = vpack.c.b16 %v2390, %v2388
        %v2445 = vpack.c.b16 %v2393, %v2391
        %v2446 = vpack.c.b16 %v2394, %v2392
        %v2447 = vpack.c.b16 %v2397, %v2395
        %v2448 = vpack.c.b16 %v2398, %v2396
        %v2449 = vpack.c.b16 %v2401, %v2399
        %v2450 = vpack.c.b16 %v2402, %v2400
        %v2451 = vpack.c.b16 %v2405, %v2403
        %v2452 = vpack.c.b16 %v2406, %v2404
        %v2453 = vpack.c.b16 %v2409, %v2407
        %v2454 = vpack.c.b16 %v2410, %v2408
        %v2455 = vpack.c.b16 %v2413, %v2411
        %v2456 = vpack.c.b16 %v2414, %v2412
        %v2457 = vpack.c.b16 %v2417, %v2415
        %v2458 = vpack.c.b16 %v2418, %v2416
        %v2459 = vpack.c.b16 %v2421, %v2419
        %v2460 = vpack.c.b16 %v2422, %v2420
        %v2461 = vpack.c.b16 %v2425, %v2423
        %v2462 = vpack.c.b16 %v2426, %v2424
        %v2463 = vpack.c.b16 %v2429, %v2427
        %v2464 = vpack.c.b16 %v2430, %v2428
        %v2465 = vpack.c.b16 %v2433, %v2431
        %v2466 = vpack.c.b16 %v2434, %v2432
        %2499 = vmatprep.subr.bf16.mxu0 %v2436
        %2500 = vmatpush1.bf16.msra.mxu0 %v2435
        %2501 = vmatprep.subr.bf16.mxu0 %v2438
        %2502 = vmatpush1.bf16.msra.mxu0 %v2437
        %2503 = vmatprep.subr.bf16.mxu0 %v2440
        %2504 = vmatpush1.bf16.msra.mxu0 %v2439
        %2505 = vmatprep.subr.bf16.mxu0 %v2442
        %2506 = vmatpush1.bf16.msra.mxu0 %v2441
        %2507 = vmatprep.subr.bf16.mxu0 %v2444
        %2508 = vmatpush1.bf16.msra.mxu0 %v2443
        %2509 = vmatprep.subr.bf16.mxu0 %v2446
        %2510 = vmatpush1.bf16.msra.mxu0 %v2445
        %2511 = vmatprep.subr.bf16.mxu0 %v2448
        %2512 = vmatpush1.bf16.msra.mxu0 %v2447
        %2513 = vmatprep.subr.bf16.mxu0 %v2450
        %2514 = vmatpush1.bf16.msra.mxu0 %v2449
        %2515 = vmatprep.subr.bf16.mxu0 %v2452
        %2516 = vmatpush1.bf16.msra.mxu0 %v2451
        %2517 = vmatprep.subr.bf16.mxu0 %v2454
        %2518 = vmatpush1.bf16.msra.mxu0 %v2453
        %2519 = vmatprep.subr.bf16.mxu0 %v2456
        %2520 = vmatpush1.bf16.msra.mxu0 %v2455
        %2521 = vmatprep.subr.bf16.mxu0 %v2458
        %2522 = vmatpush1.bf16.msra.mxu0 %v2457
        %2523 = vmatprep.subr.bf16.mxu0 %v2460
        %2524 = vmatpush1.bf16.msra.mxu0 %v2459
        %2525 = vmatprep.subr.bf16.mxu0 %v2462
        %2526 = vmatpush1.bf16.msra.mxu0 %v2461
        %2527 = vmatprep.subr.bf16.mxu0 %v2464
        %2528 = vmatpush1.bf16.msra.mxu0 %v2463
        %2529 = vmatprep.subr.bf16.mxu0 %v2466
        %2530 = vmatpush1.bf16.msra.mxu0 %v2465
        %2531 = vmatprep.mubr.bf16.mxu0 %v2301
        %2532 = vmatmul.mubr.bf16.gmra.mrb[0].mxu0 %v2300
        %v2533 = vpop.f32.mrb[0].mxu0
        %v2534 = vadd.f32 0.0, %v2533
        %v2535 = vpop.f32.mrb[0].mxu0
        %v2536 = vadd.f32 0.0, %v2535
        %v2537 = vpop.f32.mrb[0].mxu0
        %v2538 = vpop.f32.mrb[0].mxu0
        %2539 = vdwg.mxu0
        %v2540 = vpack.c.bf16 %v2534, %v2534
        %v2541 = vpack.c.bf16 %v2536, %v2536
        %v2543 = vlaneseq
        %v2544 = vshrl.u32 %v2543, 7
        %v2545 = vsub.s32 0, %v2544
        %v2546 = vrot.slane %v2336, %v2545
        %v2547 = vlaneseq
        %v2548 = vshrl.u32 %v2547, 7
        %v2549 = vsub.s32 1, %v2548
        %v2550 = vrot.slane %v2336, %v2549
        %v2553 = vpack.c.bf16 %v2546, %v2546
        %v2554 = vpack.c.bf16 %v2550, %v2550
        %v2556 = vpack.i.b16 %v2553, %v2553
        %v2558 = vlaneseq
        %v2559 = vshrl.u32 %v2558, 7
        %v2560 = vsub.s32 0, %v2559
        %v2561 = vrot.slane %v2556, %v2560
        %v2563 = vpack.i.b16 %v2554, %v2554
        %v2565 = vlaneseq
        %v2566 = vshrl.u32 %v2565, 7
        %v2567 = vsub.s32 0, %v2566
        %v2568 = vrot.slane %v2563, %v2567
        %v2569 = vadd.bf16 %v2540, %v2561
        %v2570 = vadd.bf16 %v2541, %v2568
        %vm2571 = vcmp.gt.bf16.partialorder %v2569, 0
        %vm2572 = vcmp.gt.bf16.partialorder %v2570, 0
        %v2574 = vlaneseq
        %v2575 = vshrl.u32 %v2574, 7
        %v2576 = vsub.s32 0, %v2575
        %v2577 = vrot.slane %v2338, %v2576
        %v2578 = vlaneseq
        %v2579 = vshrl.u32 %v2578, 7
        %v2580 = vsub.s32 1, %v2579
        %v2581 = vrot.slane %v2338, %v2580
        %v2584 = vpack.c.bf16 %v2577, %v2577
        %v2585 = vpack.c.bf16 %v2581, %v2581
        %v2587 = vpack.i.b16 %v2584, %v2584
        %v2589 = vlaneseq
        %v2590 = vshrl.u32 %v2589, 7
        %v2591 = vsub.s32 0, %v2590
        %v2592 = vrot.slane %v2587, %v2591
        %v2594 = vpack.i.b16 %v2585, %v2585
        %v2596 = vlaneseq
        %v2597 = vshrl.u32 %v2596, 7
        %v2598 = vsub.s32 0, %v2597
        %v2599 = vrot.slane %v2594, %v2598
        %v2600 = vmul.bf16 %v2592, %v2569
        %v2601 = vmul.bf16 %v2599, %v2570
        %v2602 = vsel %vm2571, %v2569, %v2600
        %v2603 = vsel %vm2572, %v2570, %v2601
        %v2604 = vadd.bf16 %v2602, %v1998
        %v2605 = vadd.bf16 %v2603, %v1999
        %v2606 = vld [vmem:[%s488] sm:$0xf]
        %v2607 = vld [vmem:[%s488 + $0x4] sm:$0xf]
        %v2608 = vld [vmem:[%s488 + $0x8] sm:$0xf]
        %v2609 = vld [vmem:[%s488 + $0xc] sm:$0xf]
        %v2610 = vld [vmem:[%s488 + $0x10] sm:$0xf]
        %v2611 = vld [vmem:[%s488 + $0x14] sm:$0xf]
        %v2612 = vld [vmem:[%s488 + $0x18] sm:$0xf]
        %v2613 = vld [vmem:[%s488 + $0x1c] sm:$0xf]
        %v2614 = vld [vmem:[%s488 + $0x20] sm:$0xf]
        %v2615 = vld [vmem:[%s488 + $0x24] sm:$0xf]
        %v2616 = vld [vmem:[%s488 + $0x28] sm:$0xf]
        %v2617 = vld [vmem:[%s488 + $0x2c] sm:$0xf]
        %v2618 = vld [vmem:[%s488 + $0x30] sm:$0xf]
        %v2619 = vld [vmem:[%s488 + $0x34] sm:$0xf]
        %v2620 = vld [vmem:[%s488 + $0x38] sm:$0xf]
        %v2621 = vld [vmem:[%s488 + $0x3c] sm:$0xf]
        %v2622 = vld [vmem:[%s488 + $0x40] sm:$0xf]
        %v2623 = vld [vmem:[%s488 + $0x44] sm:$0xf]
        %v2624 = vld [vmem:[%s488 + $0x48] sm:$0xf]
        %v2625 = vld [vmem:[%s488 + $0x4c] sm:$0xf]
        %v2626 = vld [vmem:[%s488 + $0x50] sm:$0xf]
        %v2627 = vld [vmem:[%s488 + $0x54] sm:$0xf]
        %v2628 = vld [vmem:[%s488 + $0x58] sm:$0xf]
        %v2629 = vld [vmem:[%s488 + $0x5c] sm:$0xf]
        %v2630 = vld [vmem:[%s488 + $0x60] sm:$0xf]
        %v2631 = vld [vmem:[%s488 + $0x64] sm:$0xf]
        %v2632 = vld [vmem:[%s488 + $0x68] sm:$0xf]
        %v2633 = vld [vmem:[%s488 + $0x6c] sm:$0xf]
        %v2634 = vld [vmem:[%s488 + $0x70] sm:$0xf]
        %v2635 = vld [vmem:[%s488 + $0x74] sm:$0xf]
        %v2636 = vld [vmem:[%s488 + $0x78] sm:$0xf]
        %v2637 = vld [vmem:[%s488 + $0x7c] sm:$0xf]
        %v2638 = vld [vmem:[%s496] sm:$0x1]
        %v2640 = vlaneseq
        %v2641 = vshrl.u32 %v2640, 7
        %v2642 = vsub.s32 0, %v2641
        %v2643 = vrot.slane %v2638, %v2642
        %v2677 = vunpack.c.l.b16 %v2606
        %v2678 = vunpack.c.l.b16 %v2607
        %v2679 = vunpack.c.l.b16 %v2608
        %v2680 = vunpack.c.l.b16 %v2609
        %v2681 = vunpack.c.l.b16 %v2610
        %v2682 = vunpack.c.l.b16 %v2611
        %v2683 = vunpack.c.l.b16 %v2612
        %v2684 = vunpack.c.l.b16 %v2613
        %v2685 = vunpack.c.l.b16 %v2614
        %v2686 = vunpack.c.l.b16 %v2615
        %v2687 = vunpack.c.l.b16 %v2616
        %v2688 = vunpack.c.l.b16 %v2617
        %v2689 = vunpack.c.l.b16 %v2618
        %v2690 = vunpack.c.l.b16 %v2619
        %v2691 = vunpack.c.l.b16 %v2620
        %v2692 = vunpack.c.l.b16 %v2621
        %v2693 = vunpack.c.l.b16 %v2622
        %v2694 = vunpack.c.l.b16 %v2623
        %v2695 = vunpack.c.l.b16 %v2624
        %v2696 = vunpack.c.l.b16 %v2625
        %v2697 = vunpack.c.l.b16 %v2626
        %v2698 = vunpack.c.l.b16 %v2627
        %v2699 = vunpack.c.l.b16 %v2628
        %v2700 = vunpack.c.l.b16 %v2629
        %v2701 = vunpack.c.l.b16 %v2630
        %v2702 = vunpack.c.l.b16 %v2631
        %v2703 = vunpack.c.l.b16 %v2632
        %v2704 = vunpack.c.l.b16 %v2633
        %v2705 = vunpack.c.l.b16 %v2634
        %v2706 = vunpack.c.l.b16 %v2635
        %v2707 = vunpack.c.l.b16 %v2636
        %v2708 = vunpack.c.l.b16 %v2637
        %v2709 = vpack.c.b16 %v2678, %v2677
        %v2710 = vpack.c.b16 %v2680, %v2679
        %v2711 = vpack.c.b16 %v2682, %v2681
        %v2712 = vpack.c.b16 %v2684, %v2683
        %v2713 = vpack.c.b16 %v2686, %v2685
        %v2714 = vpack.c.b16 %v2688, %v2687
        %v2715 = vpack.c.b16 %v2690, %v2689
        %v2716 = vpack.c.b16 %v2692, %v2691
        %v2717 = vpack.c.b16 %v2694, %v2693
        %v2718 = vpack.c.b16 %v2696, %v2695
        %v2719 = vpack.c.b16 %v2698, %v2697
        %v2720 = vpack.c.b16 %v2700, %v2699
        %v2721 = vpack.c.b16 %v2702, %v2701
        %v2722 = vpack.c.b16 %v2704, %v2703
        %v2723 = vpack.c.b16 %v2706, %v2705
        %v2724 = vpack.c.b16 %v2708, %v2707
        %2741 = vmatprep.subr.bf16.mxu0 0
        %2742 = vmatpush1.bf16.msra.mxu0 %v2709
        %2743 = vmatprep.subr.bf16.mxu0 0
        %2744 = vmatpush1.bf16.msra.mxu0 %v2710
        %2745 = vmatprep.subr.bf16.mxu0 0
        %2746 = vmatpush1.bf16.msra.mxu0 %v2711
        %2747 = vmatprep.subr.bf16.mxu0 0
        %2748 = vmatpush1.bf16.msra.mxu0 %v2712
        %2749 = vmatprep.subr.bf16.mxu0 0
        %2750 = vmatpush1.bf16.msra.mxu0 %v2713
        %2751 = vmatprep.subr.bf16.mxu0 0
        %2752 = vmatpush1.bf16.msra.mxu0 %v2714
        %2753 = vmatprep.subr.bf16.mxu0 0
        %2754 = vmatpush1.bf16.msra.mxu0 %v2715
        %2755 = vmatprep.subr.bf16.mxu0 0
        %2756 = vmatpush1.bf16.msra.mxu0 %v2716
        %2757 = vmatprep.subr.bf16.mxu0 0
        %2758 = vmatpush1.bf16.msra.mxu0 %v2717
        %2759 = vmatprep.subr.bf16.mxu0 0
        %2760 = vmatpush1.bf16.msra.mxu0 %v2718
        %2761 = vmatprep.subr.bf16.mxu0 0
        %2762 = vmatpush1.bf16.msra.mxu0 %v2719
        %2763 = vmatprep.subr.bf16.mxu0 0
        %2764 = vmatpush1.bf16.msra.mxu0 %v2720
        %2765 = vmatprep.subr.bf16.mxu0 0
        %2766 = vmatpush1.bf16.msra.mxu0 %v2721
        %2767 = vmatprep.subr.bf16.mxu0 0
        %2768 = vmatpush1.bf16.msra.mxu0 %v2722
        %2769 = vmatprep.subr.bf16.mxu0 0
        %2770 = vmatpush1.bf16.msra.mxu0 %v2723
        %2771 = vmatprep.subr.bf16.mxu0 0
        %2772 = vmatpush1.bf16.msra.mxu0 %v2724
        %2773 = vmatprep.mubr.bf16.mxu0 %v2605
        %2774 = vmatmul.mubr.bf16.gmra.mrb[0].mxu0 %v2604
        %v2775 = vpop.f32.mrb[0].mxu0
        %v2776 = vadd.f32 %v2643, %v2775
        %v2777 = vpop.f32.mrb[0].mxu0
        %v2778 = vpop.f32.mrb[0].mxu0
        %v2779 = vpop.f32.mrb[0].mxu0
        %2780 = vdwg.mxu0
        %2781 = vst [vmem:[%s583] sm:$0xff] %v2776
        %p2782 = scmp.lt.s32.totalorder %s35, 2
        %s2783 = scalar_select %p2782, %s35, 2
        %p2784 = scmp.lt.s32.totalorder %s36, 0
        %s2785 = scalar_select %p2784, %s36, 0
        %s2786 = sadd.s32 %s2785, %s2783
        %s2787 = smul.addr %s2786, 8
        %s2788 = scalar_lea.vmem %s8, %s2787
        // Predicated region
        $region81: #{smpl_mixik_forward.1} parent=51 // pred_check
          %p2789 = pneg %p271
        $region82: #{smpl_mixik_forward.1} parent=51 // pred_check_branch
          %2791 = sbr.rel (%p2789) target = $region84
        $region83: #{smpl_mixik_forward.1} parent=51 // pred_region
          _
        $region84: #{smpl_mixik_forward.1} parent=51 // pred_fallthru
          _
      $region52: #{smpl_mixik_forward.1} parent=5 // pred_fallthru
        _
      %p2792 = scmp.le.s32.totalorder 2, %s26
      // Predicated region
      $region85: #{smpl_mixik_forward.1} parent=5 // pred_check
        %p2793 = pneg %p2792
      $region86: #{smpl_mixik_forward.1} parent=5 // pred_check_branch
        %2795 = sbr.rel (%p2793) target = $region88
      $region87: #{smpl_mixik_forward.1} parent=5 // pred_region
        %s2796 = ssub.s32 %s26, 2
        // Predicated region
        $region89: #{smpl_mixik_forward.1} parent=87 // pred_check
          %p2797 = pneg %p277
        $region90: #{smpl_mixik_forward.1} parent=87 // pred_check_branch
          %2799 = sbr.rel (%p2797) target = $region92
        $region91: #{smpl_mixik_forward.1} parent=87 // pred_region
          %p2800 = scmp.lt.s32.totalorder %s37, 2
          %s2801 = scalar_select %p2800, %s37, 2
          %p2802 = scmp.lt.s32.totalorder %s38, 0
          %s2803 = scalar_select %p2802, %s38, 0
          %s2804 = sadd.s32 %s2803, %s2801
          %s2805 = smul.addr %s2804, 8
          %s2806 = scalar_lea.vmem %s8, %s2805
        $region92: #{smpl_mixik_forward.1} parent=87 // pred_fallthru
          _
      $region88: #{smpl_mixik_forward.1} parent=5 // pred_fallthru
        _
    $region6: #{smpl_mixik_forward.1} parent=1 // loop_footer
      %s30 = sadd.s32 1, %s26
    $region7: #{smpl_mixik_forward.1} parent=1 // loop_footer_branch
      %25 = sbr.rel target = $region3
    $region8: #{smpl_mixik_forward.1} parent=1 // loop_exit
      _
    %2807 = vsyncpa [#allocation3], 1
    %s2808 = scalar_lea.sflag [#allocation3], 1
    %2809 = vsyncpa %s2808, 1
    %2810 = vsyncpa [#allocation5], 1
    %s2811 = scalar_lea.sflag [#allocation5], 1
    %2812 = vsyncpa %s2811, 1
    %2813 = vsyncpa [#allocation8], 1
    %s2814 = scalar_lea.sflag [#allocation8], 1
    %2815 = vsyncpa %s2814, 1
    %2816 = vsyncpa [#allocation11], 1
    %s2817 = scalar_lea.sflag [#allocation11], 1
    %2818 = vsyncpa %s2817, 1

</llo_original>
